<compile_context>
chip_gen: v7x
topology: tpu7x:2x2x1
jax: 0.10.0
libtpu: 0.0.40
codegen_flags: <defaults>
</compile_context>

<pallas_src>
import jax
import jax.numpy as jnp
from jax.experimental import pallas as pl
from jax.experimental.pallas import tpu as pltpu


# ----------------------------- Pallas kernel --------------------------------
def dynamics_kernel(t_ref,        # SMEM (T,)             float32 time points
                    b_dec_ref,    # SMEM (1,)             float32 decode bias
                    xT_ref,       # VMEM (D_in, tile_n)   node features^T
                    w_encT_ref,   # VMEM (H, D_in)        W_enc^T
                    b_enc_ref,    # VMEM (H, 1)
                    w_odeT_ref,   # VMEM (H, H)           W_ode^T
                    b_ode_ref,    # VMEM (H, 1)
                    w_dec_ref,    # VMEM (1, H)           W_dec^T
                    out_ref):     # VMEM (T, tile_n)
    T, tile_n = out_ref.shape
    H = w_odeT_ref.shape[0]

    # ---- encoding: h = tanh(W_enc^T @ x^T + b_enc) -> (H, tile_n), lane-dense
    h = jnp.tanh(
        jnp.dot(w_encT_ref[...], xT_ref[...],
                preferred_element_type=jnp.float32)
        + b_enc_ref[...]
    )

    # Hoisted loads / broadcasts (JAX does not CSE broadcast_in_dim in loops).
    w_odeT = w_odeT_ref[...]                                  # (H, H)
    b_ode = jnp.broadcast_to(b_ode_ref[...], (H, tile_n))     # (H, tile_n)
    w_dec = w_dec_ref[...]                                    # (1, H)
    b_dec = b_dec_ref[0]

    def decode(hh):
        # (1, H) @ (H, tile_n) -> lane-dense (1, tile_n) row (unmasked vst).
        return jnp.dot(w_dec, hh, preferred_element_type=jnp.float32) + b_dec

    out_ref[pl.ds(0, 1), :] = decode(h)                       # state at t[0]

    # ---- ODE (explicit Euler) + decode at every subsequent time point.
    # T is small & static -> unrolled Python loop (identical trace to
    # lax.fori_loop(unroll=True) at this trip count).
    for k in range(1, T):
        dt = t_ref[k] - t_ref[k - 1]
        f = jnp.tanh(
            jnp.dot(w_odeT, h, preferred_element_type=jnp.float32) + b_ode
        )
        h = h + dt * f
        out_ref[pl.ds(k, 1), :] = decode(h)


# ------------------------------ wrapper --------------------------------------
def _pick_tile_n(n, cap=4096):
    """Largest multiple-of-128 divisor of n (capped).  Prefer >= 2 grid steps
    (keeps both v7x TensorCores busy) only when the resulting tiles are still
    >= 512 lanes, so per-grid-step overhead never dominates."""
    divisors = [d for d in range(128, min(n, cap) + 1, 128) if n % d == 0]
    if not divisors:
        raise ValueError("padded N must be a multiple of 128")
    multi = [d for d in divisors if n // d >= 2 and d >= 512]
    return max(multi) if multi else max(divisors)


def dynamics_model_forward(feat, gdv, pr, t, params, *, tile_n=None):
    """Pallas forward pass of DynamicsModel.

    feat: (N, num_feat), gdv: (N, num_gdv), pr: (N, 1)  float32
    t:    (T,)                                          float32
    returns: (T, N, 1) float32  (matches torch.stack(decoding_out))
    """
    x = jnp.concatenate([feat, gdv, pr], axis=-1).astype(jnp.float32)
    N, d_in = x.shape
    T = int(t.shape[0])
    H = params["w_enc"].shape[1]

    # Pad node count up to a multiple of 128 (lane width) if necessary.
    n_pad = (-N) % 128
    if n_pad:
        x = jnp.pad(x, ((0, n_pad), (0, 0)))
    n_total = N + n_pad

    if tile_n is None:
        tile_n = _pick_tile_n(n_total)
    assert n_total % tile_n == 0, "padded N must be a multiple of tile_n"

    # nodes-on-lanes layout: features transposed to (D_in, N); weights
    # transposed / reshaped once here (tiny arrays, negligible cost).
    x_T = x.T                                                    # (d_in, n_total)
    w_encT = params["w_enc"].T.astype(jnp.float32)               # (H, d_in)
    b_enc = params["b_enc"].reshape(H, 1).astype(jnp.float32)    # (H, 1)
    w_odeT = params["w_ode"].T.astype(jnp.float32)               # (H, H)
    b_ode = params["b_ode"].reshape(H, 1).astype(jnp.float32)    # (H, 1)
    w_dec = params["w_dec"].reshape(1, H).astype(jnp.float32)    # (1, H)
    b_dec = params["b_dec"].reshape(1).astype(jnp.float32)       # (1,)

    grid = (n_total // tile_n,)

    out = pl.pallas_call(
        dynamics_kernel,
        out_shape=jax.ShapeDtypeStruct((T, n_total), jnp.float32),
        grid=grid,
        in_specs=[
            pl.BlockSpec(memory_space=pltpu.MemorySpace.SMEM),    # t
            pl.BlockSpec(memory_space=pltpu.MemorySpace.SMEM),    # b_dec
            pl.BlockSpec((d_in, tile_n), lambda i: (0, i)),       # x^T tile
            pl.BlockSpec((H, d_in), lambda i: (0, 0)),            # W_enc^T
            pl.BlockSpec((H, 1), lambda i: (0, 0)),               # b_enc
            pl.BlockSpec((H, H), lambda i: (0, 0)),               # W_ode^T
            pl.BlockSpec((H, 1), lambda i: (0, 0)),               # b_ode
            pl.BlockSpec((1, H), lambda i: (0, 0)),               # W_dec^T
        ],
        out_specs=pl.BlockSpec((T, tile_n), lambda i: (0, i)),
        compiler_params=pltpu.CompilerParams(
            dimension_semantics=("parallel",),
            vmem_limit_bytes=32 * 1024 * 1024,
        ),
    )(t.astype(jnp.float32), b_dec, x_T, w_encT, b_enc, w_odeT, b_ode, w_dec)

    if n_pad:
        out = out[:, :N]
    return out[..., None]  # (T, N, 1)


# ------------------------- pure-JAX reference --------------------------------
def dynamics_reference(feat, gdv, pr, t, params):
    x = jnp.concatenate([feat, gdv, pr], axis=-1).astype(jnp.float32)
    h = jnp.tanh(x @ params["w_enc"] + params["b_enc"])
    ys = [h @ params["w_dec"] + params["b_dec"]]
    for k in range(1, t.shape[0]):
        dt = t[k] - t[k - 1]
        h = h + dt * jnp.tanh(h @ params["w_ode"] + params["b_ode"])
        ys.append(h @ params["w_dec"] + params["b_dec"])
    return jnp.stack(ys, axis=0)   # (T, N, 1)


# ------------------------- deterministic params ------------------------------
def init_params(key, num_feat, num_gdv, num_pr, hidden):
    d_in = num_feat + num_gdv + num_pr
    k1, k2, k3 = jax.random.split(key, 3)
    scale = 0.1
    return {
        "w_enc": scale * jax.random.normal(k1, (d_in, hidden), jnp.float32),
        "b_enc": jnp.zeros((1, hidden), jnp.float32),
        "w_ode": scale * jax.random.normal(k2, (hidden, hidden), jnp.float32),
        "b_ode": jnp.zeros((1, hidden), jnp.float32),
        "w_dec": scale * jax.random.normal(k3, (hidden, 1), jnp.float32),
        "b_dec": jnp.zeros((1, 1), jnp.float32),
    }


if __name__ == "__main__":
    # Small, module-consistent shapes.
    N = 256            # graph nodes
    NUM_FEAT = 8
    NUM_GDV = 12
    NUM_PR = 1
    HIDDEN = 32        # args.encoding_layer_config
    T = 8              # time_length

    key = jax.random.PRNGKey(0)
    kf, kg, kp = jax.random.split(key, 3)
    feat = jax.random.normal(kf, (N, NUM_FEAT), jnp.float32)
    gdv = jax.random.normal(kg, (N, NUM_GDV), jnp.float32)
    pr = jax.random.uniform(kp, (N, NUM_PR), jnp.float32)
    t = jnp.linspace(0.0, 1.0, T, dtype=jnp.float32)

    params = init_params(jax.random.PRNGKey(42), NUM_FEAT, NUM_GDV, NUM_PR, HIDDEN)

    out = dynamics_model_forward(feat, gdv, pr, t, params)
    jax.block_until_ready(out)
    assert out.shape == (T, N, 1), out.shape

    ref = dynamics_reference(feat, gdv, pr, t, params)
    err = float(jnp.max(jnp.abs(out - ref)))
    assert jnp.allclose(out, ref, atol=1e-2, rtol=1e-2), err

    print("KERNEL_OK")
</pallas_src>

<mosaic_0001>
module attributes {stable_mosaic.version = 11 : i64} {
  func.func @dynamics_kernel(%arg0: i32, %arg1: memref<8xf32, #tpu.memory_space<smem>>, %arg2: memref<1xf32, #tpu.memory_space<smem>>, %arg3: memref<21x256xf32, #tpu.memory_space<vmem>>, %arg4: memref<32x21xf32, #tpu.memory_space<vmem>>, %arg5: memref<32x1xf32, #tpu.memory_space<vmem>>, %arg6: memref<32x32xf32, #tpu.memory_space<vmem>>, %arg7: memref<32x1xf32, #tpu.memory_space<vmem>>, %arg8: memref<1x32xf32, #tpu.memory_space<vmem>>, %arg9: memref<8x256xf32, #tpu.memory_space<vmem>>) attributes {dimension_semantics = [#tpu.dimension_semantics<parallel>], iteration_bounds = array<i64: 1>, scalar_prefetch = 0 : i64, scratch_operands = 0 : i64, tpu.core_type = #tpu.core_type<tc>, window_params = [{transform_indices = @transform_0, window_bounds = array<i64: 8>}, {transform_indices = @transform_1, window_bounds = array<i64: 1>}, {transform_indices = @transform_2, window_bounds = array<i64: 21, 256>}, {pipeline_mode = #tpu.pipeline_mode<synchronous>, transform_indices = @transform_3, window_bounds = array<i64: 32, 21>}, {pipeline_mode = #tpu.pipeline_mode<synchronous>, transform_indices = @transform_4, window_bounds = array<i64: 32, 1>}, {pipeline_mode = #tpu.pipeline_mode<synchronous>, transform_indices = @transform_5, window_bounds = array<i64: 32, 32>}, {pipeline_mode = #tpu.pipeline_mode<synchronous>, transform_indices = @transform_6, window_bounds = array<i64: 32, 1>}, {pipeline_mode = #tpu.pipeline_mode<synchronous>, transform_indices = @transform_7, window_bounds = array<i64: 1, 32>}, {transform_indices = @transform_8, window_bounds = array<i64: 8, 256>}]} {
    %c0 = arith.constant 0 : index
    %c0_0 = arith.constant 0 : index
    %0 = vector.load %arg4[%c0, %c0_0] : memref<32x21xf32, #tpu.memory_space<vmem>>, vector<32x21xf32>
    %c0_1 = arith.constant 0 : index
    %c0_2 = arith.constant 0 : index
    %1 = vector.load %arg3[%c0_1, %c0_2] : memref<21x256xf32, #tpu.memory_space<vmem>>, vector<21x256xf32>
    %cst = arith.constant dense<0.000000e+00> : vector<32x256xf32>
    %2 = tpu.matmul %0, %1, %cst {dimension_numbers = #tpu.dot_dimension_numbers<[1], [0], [0], [1], [0, 0, 1, 1], [], []>} : vector<32x21xf32>, vector<21x256xf32>, vector<32x256xf32> -> vector<32x256xf32>
    %c0_3 = arith.constant 0 : index
    %c0_4 = arith.constant 0 : index
    %3 = vector.load %arg5[%c0_3, %c0_4] : memref<32x1xf32, #tpu.memory_space<vmem>>, vector<32x1xf32>
    %4 = vector.broadcast %3 : vector<32x1xf32> to vector<32x256xf32>
    %5 = arith.addf %2, %4 : vector<32x256xf32>
    %6 = math.tanh %5 : vector<32x256xf32>
    %c0_5 = arith.constant 0 : index
    %c0_6 = arith.constant 0 : index
    %7 = vector.load %arg6[%c0_5, %c0_6] : memref<32x32xf32, #tpu.memory_space<vmem>>, vector<32x32xf32>
    %c0_7 = arith.constant 0 : index
    %c0_8 = arith.constant 0 : index
    %8 = vector.load %arg7[%c0_7, %c0_8] : memref<32x1xf32, #tpu.memory_space<vmem>>, vector<32x1xf32>
    %9 = vector.shape_cast %8 : vector<32x1xf32> to vector<32x1xf32>
    %10 = vector.broadcast %9 : vector<32x1xf32> to vector<32x256xf32>
    %c0_9 = arith.constant 0 : index
    %c0_10 = arith.constant 0 : index
    %11 = vector.load %arg8[%c0_9, %c0_10] : memref<1x32xf32, #tpu.memory_space<vmem>>, vector<1x32xf32>
    %c0_11 = arith.constant 0 : index
    %12 = memref.load %arg2[%c0_11] : memref<1xf32, #tpu.memory_space<smem>>
    %cst_12 = arith.constant dense<0.000000e+00> : vector<1x256xf32>
    %13 = tpu.matmul %11, %6, %cst_12 {dimension_numbers = #tpu.dot_dimension_numbers<[1], [0], [0], [1], [0, 0, 1, 1], [], []>} : vector<1x32xf32>, vector<32x256xf32>, vector<1x256xf32> -> vector<1x256xf32>
    %14 = vector.broadcast %12 : f32 to vector<1x256xf32>
    %15 = arith.addf %13, %14 : vector<1x256xf32>
    %c0_13 = arith.constant 0 : index
    %c0_14 = arith.constant 0 : index
    %16 = vector.load %arg9[%c0_13, %c0_14] : memref<8x256xf32, #tpu.memory_space<vmem>>, vector<1x256xf32>
    tpu.vector_store %arg9[%c0_13, %c0_14], %15 {strides = array<i32>} : memref<8x256xf32, #tpu.memory_space<vmem>>, vector<1x256xf32>,
    %c1 = arith.constant 1 : index
    %17 = memref.load %arg1[%c1] : memref<8xf32, #tpu.memory_space<smem>>
    %c0_15 = arith.constant 0 : index
    %18 = memref.load %arg1[%c0_15] : memref<8xf32, #tpu.memory_space<smem>>
    %19 = arith.subf %17, %18 : f32
    %cst_16 = arith.constant dense<0.000000e+00> : vector<32x256xf32>
    %20 = tpu.matmul %7, %6, %cst_16 {dimension_numbers = #tpu.dot_dimension_numbers<[1], [0], [0], [1], [0, 0, 1, 1], [], []>} : vector<32x32xf32>, vector<32x256xf32>, vector<32x256xf32> -> vector<32x256xf32>
    %21 = arith.addf %20, %10 : vector<32x256xf32>
    %22 = math.tanh %21 : vector<32x256xf32>
    %23 = vector.broadcast %19 : f32 to vector<32x256xf32>
    %24 = arith.mulf %23, %22 : vector<32x256xf32>
    %25 = arith.addf %6, %24 : vector<32x256xf32>
    %cst_17 = arith.constant dense<0.000000e+00> : vector<1x256xf32>
    %26 = tpu.matmul %11, %25, %cst_17 {dimension_numbers = #tpu.dot_dimension_numbers<[1], [0], [0], [1], [0, 0, 1, 1], [], []>} : vector<1x32xf32>, vector<32x256xf32>, vector<1x256xf32> -> vector<1x256xf32>
    %27 = vector.broadcast %12 : f32 to vector<1x256xf32>
    %28 = arith.addf %26, %27 : vector<1x256xf32>
    %c1_18 = arith.constant 1 : index
    %c0_19 = arith.constant 0 : index
    %29 = vector.load %arg9[%c1_18, %c0_19] : memref<8x256xf32, #tpu.memory_space<vmem>>, vector<1x256xf32>
    tpu.vector_store %arg9[%c1_18, %c0_19], %28 {strides = array<i32>} : memref<8x256xf32, #tpu.memory_space<vmem>>, vector<1x256xf32>,
    %c2 = arith.constant 2 : index
    %30 = memref.load %arg1[%c2] : memref<8xf32, #tpu.memory_space<smem>>
    %c1_20 = arith.constant 1 : index
    %31 = memref.load %arg1[%c1_20] : memref<8xf32, #tpu.memory_space<smem>>
    %32 = arith.subf %30, %31 : f32
    %cst_21 = arith.constant dense<0.000000e+00> : vector<32x256xf32>
    %33 = tpu.matmul %7, %25, %cst_21 {dimension_numbers = #tpu.dot_dimension_numbers<[1], [0], [0], [1], [0, 0, 1, 1], [], []>} : vector<32x32xf32>, vector<32x256xf32>, vector<32x256xf32> -> vector<32x256xf32>
    %34 = arith.addf %33, %10 : vector<32x256xf32>
    %35 = math.tanh %34 : vector<32x256xf32>
    %36 = vector.broadcast %32 : f32 to vector<32x256xf32>
    %37 = arith.mulf %36, %35 : vector<32x256xf32>
    %38 = arith.addf %25, %37 : vector<32x256xf32>
    %cst_22 = arith.constant dense<0.000000e+00> : vector<1x256xf32>
    %39 = tpu.matmul %11, %38, %cst_22 {dimension_numbers = #tpu.dot_dimension_numbers<[1], [0], [0], [1], [0, 0, 1, 1], [], []>} : vector<1x32xf32>, vector<32x256xf32>, vector<1x256xf32> -> vector<1x256xf32>
    %40 = vector.broadcast %12 : f32 to vector<1x256xf32>
    %41 = arith.addf %39, %40 : vector<1x256xf32>
    %c2_23 = arith.constant 2 : index
    %c0_24 = arith.constant 0 : index
    %42 = vector.load %arg9[%c2_23, %c0_24] : memref<8x256xf32, #tpu.memory_space<vmem>>, vector<1x256xf32>
    tpu.vector_store %arg9[%c2_23, %c0_24], %41 {strides = array<i32>} : memref<8x256xf32, #tpu.memory_space<vmem>>, vector<1x256xf32>,
    %c3 = arith.constant 3 : index
    %43 = memref.load %arg1[%c3] : memref<8xf32, #tpu.memory_space<smem>>
    %c2_25 = arith.constant 2 : index
    %44 = memref.load %arg1[%c2_25] : memref<8xf32, #tpu.memory_space<smem>>
    %45 = arith.subf %43, %44 : f32
    %cst_26 = arith.constant dense<0.000000e+00> : vector<32x256xf32>
    %46 = tpu.matmul %7, %38, %cst_26 {dimension_numbers = #tpu.dot_dimension_numbers<[1], [0], [0], [1], [0, 0, 1, 1], [], []>} : vector<32x32xf32>, vector<32x256xf32>, vector<32x256xf32> -> vector<32x256xf32>
    %47 = arith.addf %46, %10 : vector<32x256xf32>
    %48 = math.tanh %47 : vector<32x256xf32>
    %49 = vector.broadcast %45 : f32 to vector<32x256xf32>
    %50 = arith.mulf %49, %48 : vector<32x256xf32>
    %51 = arith.addf %38, %50 : vector<32x256xf32>
    %cst_27 = arith.constant dense<0.000000e+00> : vector<1x256xf32>
    %52 = tpu.matmul %11, %51, %cst_27 {dimension_numbers = #tpu.dot_dimension_numbers<[1], [0], [0], [1], [0, 0, 1, 1], [], []>} : vector<1x32xf32>, vector<32x256xf32>, vector<1x256xf32> -> vector<1x256xf32>
    %53 = vector.broadcast %12 : f32 to vector<1x256xf32>
    %54 = arith.addf %52, %53 : vector<1x256xf32>
    %c3_28 = arith.constant 3 : index
    %c0_29 = arith.constant 0 : index
    %55 = vector.load %arg9[%c3_28, %c0_29] : memref<8x256xf32, #tpu.memory_space<vmem>>, vector<1x256xf32>
    tpu.vector_store %arg9[%c3_28, %c0_29], %54 {strides = array<i32>} : memref<8x256xf32, #tpu.memory_space<vmem>>, vector<1x256xf32>,
    %c4 = arith.constant 4 : index
    %56 = memref.load %arg1[%c4] : memref<8xf32, #tpu.memory_space<smem>>
    %c3_30 = arith.constant 3 : index
    %57 = memref.load %arg1[%c3_30] : memref<8xf32, #tpu.memory_space<smem>>
    %58 = arith.subf %56, %57 : f32
    %cst_31 = arith.constant dense<0.000000e+00> : vector<32x256xf32>
    %59 = tpu.matmul %7, %51, %cst_31 {dimension_numbers = #tpu.dot_dimension_numbers<[1], [0], [0], [1], [0, 0, 1, 1], [], []>} : vector<32x32xf32>, vector<32x256xf32>, vector<32x256xf32> -> vector<32x256xf32>
    %60 = arith.addf %59, %10 : vector<32x256xf32>
    %61 = math.tanh %60 : vector<32x256xf32>
    %62 = vector.broadcast %58 : f32 to vector<32x256xf32>
    %63 = arith.mulf %62, %61 : vector<32x256xf32>
    %64 = arith.addf %51, %63 : vector<32x256xf32>
    %cst_32 = arith.constant dense<0.000000e+00> : vector<1x256xf32>
    %65 = tpu.matmul %11, %64, %cst_32 {dimension_numbers = #tpu.dot_dimension_numbers<[1], [0], [0], [1], [0, 0, 1, 1], [], []>} : vector<1x32xf32>, vector<32x256xf32>, vector<1x256xf32> -> vector<1x256xf32>
    %66 = vector.broadcast %12 : f32 to vector<1x256xf32>
    %67 = arith.addf %65, %66 : vector<1x256xf32>
    %c4_33 = arith.constant 4 : index
    %c0_34 = arith.constant 0 : index
    %68 = vector.load %arg9[%c4_33, %c0_34] : memref<8x256xf32, #tpu.memory_space<vmem>>, vector<1x256xf32>
    tpu.vector_store %arg9[%c4_33, %c0_34], %67 {strides = array<i32>} : memref<8x256xf32, #tpu.memory_space<vmem>>, vector<1x256xf32>,
    %c5 = arith.constant 5 : index
    %69 = memref.load %arg1[%c5] : memref<8xf32, #tpu.memory_space<smem>>
    %c4_35 = arith.constant 4 : index
    %70 = memref.load %arg1[%c4_35] : memref<8xf32, #tpu.memory_space<smem>>
    %71 = arith.subf %69, %70 : f32
    %cst_36 = arith.constant dense<0.000000e+00> : vector<32x256xf32>
    %72 = tpu.matmul %7, %64, %cst_36 {dimension_numbers = #tpu.dot_dimension_numbers<[1], [0], [0], [1], [0, 0, 1, 1], [], []>} : vector<32x32xf32>, vector<32x256xf32>, vector<32x256xf32> -> vector<32x256xf32>
    %73 = arith.addf %72, %10 : vector<32x256xf32>
    %74 = math.tanh %73 : vector<32x256xf32>
    %75 = vector.broadcast %71 : f32 to vector<32x256xf32>
    %76 = arith.mulf %75, %74 : vector<32x256xf32>
    %77 = arith.addf %64, %76 : vector<32x256xf32>
    %cst_37 = arith.constant dense<0.000000e+00> : vector<1x256xf32>
    %78 = tpu.matmul %11, %77, %cst_37 {dimension_numbers = #tpu.dot_dimension_numbers<[1], [0], [0], [1], [0, 0, 1, 1], [], []>} : vector<1x32xf32>, vector<32x256xf32>, vector<1x256xf32> -> vector<1x256xf32>
    %79 = vector.broadcast %12 : f32 to vector<1x256xf32>
    %80 = arith.addf %78, %79 : vector<1x256xf32>
    %c5_38 = arith.constant 5 : index
    %c0_39 = arith.constant 0 : index
    %81 = vector.load %arg9[%c5_38, %c0_39] : memref<8x256xf32, #tpu.memory_space<vmem>>, vector<1x256xf32>
    tpu.vector_store %arg9[%c5_38, %c0_39], %80 {strides = array<i32>} : memref<8x256xf32, #tpu.memory_space<vmem>>, vector<1x256xf32>,
    %c6 = arith.constant 6 : index
    %82 = memref.load %arg1[%c6] : memref<8xf32, #tpu.memory_space<smem>>
    %c5_40 = arith.constant 5 : index
    %83 = memref.load %arg1[%c5_40] : memref<8xf32, #tpu.memory_space<smem>>
    %84 = arith.subf %82, %83 : f32
    %cst_41 = arith.constant dense<0.000000e+00> : vector<32x256xf32>
    %85 = tpu.matmul %7, %77, %cst_41 {dimension_numbers = #tpu.dot_dimension_numbers<[1], [0], [0], [1], [0, 0, 1, 1], [], []>} : vector<32x32xf32>, vector<32x256xf32>, vector<32x256xf32> -> vector<32x256xf32>
    %86 = arith.addf %85, %10 : vector<32x256xf32>
    %87 = math.tanh %86 : vector<32x256xf32>
    %88 = vector.broadcast %84 : f32 to vector<32x256xf32>
    %89 = arith.mulf %88, %87 : vector<32x256xf32>
    %90 = arith.addf %77, %89 : vector<32x256xf32>
    %cst_42 = arith.constant dense<0.000000e+00> : vector<1x256xf32>
    %91 = tpu.matmul %11, %90, %cst_42 {dimension_numbers = #tpu.dot_dimension_numbers<[1], [0], [0], [1], [0, 0, 1, 1], [], []>} : vector<1x32xf32>, vector<32x256xf32>, vector<1x256xf32> -> vector<1x256xf32>
    %92 = vector.broadcast %12 : f32 to vector<1x256xf32>
    %93 = arith.addf %91, %92 : vector<1x256xf32>
    %c6_43 = arith.constant 6 : index
    %c0_44 = arith.constant 0 : index
    %94 = vector.load %arg9[%c6_43, %c0_44] : memref<8x256xf32, #tpu.memory_space<vmem>>, vector<1x256xf32>
    tpu.vector_store %arg9[%c6_43, %c0_44], %93 {strides = array<i32>} : memref<8x256xf32, #tpu.memory_space<vmem>>, vector<1x256xf32>,
    %c7 = arith.constant 7 : index
    %95 = memref.load %arg1[%c7] : memref<8xf32, #tpu.memory_space<smem>>
    %c6_45 = arith.constant 6 : index
    %96 = memref.load %arg1[%c6_45] : memref<8xf32, #tpu.memory_space<smem>>
    %97 = arith.subf %95, %96 : f32
    %cst_46 = arith.constant dense<0.000000e+00> : vector<32x256xf32>
    %98 = tpu.matmul %7, %90, %cst_46 {dimension_numbers = #tpu.dot_dimension_numbers<[1], [0], [0], [1], [0, 0, 1, 1], [], []>} : vector<32x32xf32>, vector<32x256xf32>, vector<32x256xf32> -> vector<32x256xf32>
    %99 = arith.addf %98, %10 : vector<32x256xf32>
    %100 = math.tanh %99 : vector<32x256xf32>
    %101 = vector.broadcast %97 : f32 to vector<32x256xf32>
    %102 = arith.mulf %101, %100 : vector<32x256xf32>
    %103 = arith.addf %90, %102 : vector<32x256xf32>
    %cst_47 = arith.constant dense<0.000000e+00> : vector<1x256xf32>
    %104 = tpu.matmul %11, %103, %cst_47 {dimension_numbers = #tpu.dot_dimension_numbers<[1], [0], [0], [1], [0, 0, 1, 1], [], []>} : vector<1x32xf32>, vector<32x256xf32>, vector<1x256xf32> -> vector<1x256xf32>
    %105 = vector.broadcast %12 : f32 to vector<1x256xf32>
    %106 = arith.addf %104, %105 : vector<1x256xf32>
    %c7_48 = arith.constant 7 : index
    %c0_49 = arith.constant 0 : index
    %107 = vector.load %arg9[%c7_48, %c0_49] : memref<8x256xf32, #tpu.memory_space<vmem>>, vector<1x256xf32>
    tpu.vector_store %arg9[%c7_48, %c0_49], %106 {strides = array<i32>} : memref<8x256xf32, #tpu.memory_space<vmem>>, vector<1x256xf32>,
    return
  }
  func.func @transform_0(%arg0: i32) -> i32 {
    %c0_i32 = arith.constant 0 : i32
    %c0_i32_0 = arith.constant 0 : i32
    return %c0_i32 : i32
  }
  func.func @transform_1(%arg0: i32) -> i32 {
    %c0_i32 = arith.constant 0 : i32
    %c0_i32_0 = arith.constant 0 : i32
    return %c0_i32 : i32
  }
  func.func @transform_2(%arg0: i32) -> (i32, i32) {
    %c0_i32 = arith.constant 0 : i32
    %c0_i32_0 = arith.constant 0 : i32
    return %c0_i32, %arg0 : i32, i32
  }
  func.func @transform_3(%arg0: i32) -> (i32, i32) {
    %c0_i32 = arith.constant 0 : i32
    %c0_i32_0 = arith.constant 0 : i32
    %c0_i32_1 = arith.constant 0 : i32
    return %c0_i32, %c0_i32_0 : i32, i32
  }
  func.func @transform_4(%arg0: i32) -> (i32, i32) {
    %c0_i32 = arith.constant 0 : i32
    %c0_i32_0 = arith.constant 0 : i32
    %c0_i32_1 = arith.constant 0 : i32
    return %c0_i32, %c0_i32_0 : i32, i32
  }
  func.func @transform_5(%arg0: i32) -> (i32, i32) {
    %c0_i32 = arith.constant 0 : i32
    %c0_i32_0 = arith.constant 0 : i32
    %c0_i32_1 = arith.constant 0 : i32
    return %c0_i32, %c0_i32_0 : i32, i32
  }
  func.func @transform_6(%arg0: i32) -> (i32, i32) {
    %c0_i32 = arith.constant 0 : i32
    %c0_i32_0 = arith.constant 0 : i32
    %c0_i32_1 = arith.constant 0 : i32
    return %c0_i32, %c0_i32_0 : i32, i32
  }
  func.func @transform_7(%arg0: i32) -> (i32, i32) {
    %c0_i32 = arith.constant 0 : i32
    %c0_i32_0 = arith.constant 0 : i32
    %c0_i32_1 = arith.constant 0 : i32
    return %c0_i32, %c0_i32_0 : i32, i32
  }
  func.func @transform_8(%arg0: i32) -> (i32, i32) {
    %c0_i32 = arith.constant 0 : i32
    %c0_i32_0 = arith.constant 0 : i32
    return %c0_i32, %arg0 : i32, i32
  }
}

</mosaic_0001>

<llo_original>
// kernel: tpu_custom_call.1
$region0: #{tpu_custom_call.1}
  #allocation0 [shape = 'u32[]', space=smem, size = 0x4, offset = 0x4, fixed_abs, tag = 'smem constant byte address 0x4 - core index']
  #allocation1 [shape = 'u32[144,128]{1,0:T(1,128)}', space=vmem, size = 0x12000, scoped, tag = 'internal scratch']
  #allocation2 [shape = 'f32[1]{0:T(128)S(6)}', space=smem, size = 0x200, scoped, tag = 'scoped memory for tpu_custom_call.1']
  %s0 = inlined_call_operand.vmem [shape: f32[8], index: 0, kind: input, shape index: {}]
  %s1 = inlined_call_operand.<no memory space> [shape: f32[1], index: 1, kind: input, shape index: {}]
  %s2 = inlined_call_operand.vmem [shape: f32[21,256], index: 2, kind: input, shape index: {}]
  %s3 = inlined_call_operand.vmem [shape: f32[32,21], index: 3, kind: input, shape index: {}]
  %s4 = inlined_call_operand.vmem [shape: f32[32,1], index: 4, kind: input, shape index: {}]
  %s5 = inlined_call_operand.vmem [shape: f32[32,32], index: 5, kind: input, shape index: {}]
  %s6 = inlined_call_operand.vmem [shape: f32[32,1], index: 6, kind: input, shape index: {}]
  %s7 = inlined_call_operand.vmem [shape: f32[1,32], index: 7, kind: input, shape index: {}]
  %s8 = inlined_call_operand.hbm [shape: f32[8,256], index: 8, kind: output, shape index: {}]
  %s9 = sld [smem:[#allocation0]]
  $region46: #{tpu_custom_call.1} parent=0
    _
  %s11 = ssub.s32 1, %s9
  %s12 = scalar_select 0, %s11, %s9
  %13 = sst [smem:[#allocation2]] %s1
  $region1: #{tpu_custom_call.1} parent=0
    #allocation3 [shape = 'u8[512]{0}', space=smem, size = 0x200, scoped, tag = 'input window, operand 0, single buffered']
    #allocation4 [shape = 's32[1]{0}', space=sflag, size = 0x4, scoped, tag = 'scoped memory for tpu_custom_call.1']
    #allocation5 [shape = 's32[1]{0}', space=sflag, size = 0x4, scoped, tag = 'scoped memory for tpu_custom_call.1']
    #allocation6 [shape = 'u8[8192]{0}', space=vmem, size = 0x2000, scoped, tag = 'output window, operand 0, single buffered']
    %14 = vsyncpa [#allocation5], 0
    %15 = vsyncpa [#allocation4], 0
    // Predicated region
    $region2: #{tpu_custom_call.1} parent=1 // pred_check
      _
    $region3: #{tpu_custom_call.1} parent=1 // pred_check_branch
      %17 = sbr.rel (0) target = $region5
    $region4: #{tpu_custom_call.1} parent=1 // pred_region
      %s19 = ssub.s32 16, 16
      %20 = vsyncadd [#allocation5], %s19
      %s22 = sshll.u32 %s0, 4
      %s23 = int_to_ptr.vmem [resolvable:$true] %s22
      %25 = dma.vmem_to_smem %s23, 16, [#allocation3], [#allocation5]
    $region5: #{tpu_custom_call.1} parent=1 // pred_fallthru
      _
    // Predicated region
    $region6: #{tpu_custom_call.1} parent=1 // pred_check
      _
    $region7: #{tpu_custom_call.1} parent=1 // pred_check_branch
      %27 = sbr.rel (0) target = $region9
    $region8: #{tpu_custom_call.1} parent=1 // pred_region
      _
    $region9: #{tpu_custom_call.1} parent=1 // pred_fallthru
      _
    // Predicated region
    $region10: #{tpu_custom_call.1} parent=1 // pred_check
      _
    $region11: #{tpu_custom_call.1} parent=1 // pred_check_branch
      %29 = sbr.rel (0) target = $region13
    $region12: #{tpu_custom_call.1} parent=1 // pred_region
      _
    $region13: #{tpu_custom_call.1} parent=1 // pred_fallthru
      _
    // Predicated region
    $region14: #{tpu_custom_call.1} parent=1 // pred_check
      _
    $region15: #{tpu_custom_call.1} parent=1 // pred_check_branch
      %31 = sbr.rel (0) target = $region17
    $region16: #{tpu_custom_call.1} parent=1 // pred_region
      _
    $region17: #{tpu_custom_call.1} parent=1 // pred_fallthru
      _
    // Predicated region
    $region18: #{tpu_custom_call.1} parent=1 // pred_check
      _
    $region19: #{tpu_custom_call.1} parent=1 // pred_check_branch
      %33 = sbr.rel (0) target = $region21
    $region20: #{tpu_custom_call.1} parent=1 // pred_region
      _
    $region21: #{tpu_custom_call.1} parent=1 // pred_fallthru
      _
    // Predicated region
    $region22: #{tpu_custom_call.1} parent=1 // pred_check
      _
    $region23: #{tpu_custom_call.1} parent=1 // pred_check_branch
      %35 = sbr.rel (0) target = $region25
    $region24: #{tpu_custom_call.1} parent=1 // pred_region
      _
    $region25: #{tpu_custom_call.1} parent=1 // pred_fallthru
      _
    // Predicated region
    $region26: #{tpu_custom_call.1} parent=1 // pred_check
      _
    $region27: #{tpu_custom_call.1} parent=1 // pred_check_branch
      %37 = sbr.rel (0) target = $region29
    $region28: #{tpu_custom_call.1} parent=1 // pred_region
      _
    $region29: #{tpu_custom_call.1} parent=1 // pred_fallthru
      _
    // Predicated region
    $region30: #{tpu_custom_call.1} parent=1 // pred_check
      _
    $region31: #{tpu_custom_call.1} parent=1 // pred_check_branch
      %39 = sbr.rel (0) target = $region33
    $region32: #{tpu_custom_call.1} parent=1 // pred_region
      _
    $region33: #{tpu_custom_call.1} parent=1 // pred_fallthru
      _
    // Predicated region
    $region34: #{tpu_custom_call.1} parent=1 // pred_check
      _
    $region35: #{tpu_custom_call.1} parent=1 // pred_check_branch
      %41 = sbr.rel (0) target = $region37
    $region36: #{tpu_custom_call.1} parent=1 // pred_region
      %42 = dma.done [#allocation5], 16
    $region37: #{tpu_custom_call.1} parent=1 // pred_fallthru
      _
    %43 = sfence
    %v44 = vld [vmem:[%s3] sm:$0xff]
    %v45 = vld [vmem:[%s3 + $0x8] sm:$0xff]
    %v46 = vld [vmem:[%s3 + $0x10] sm:$0xff]
    %v47 = vld [vmem:[%s3 + $0x18] sm:$0xff]
    %v48 = vld [vmem:[%s2] sm:$0xff]
    %v49 = vld [vmem:[%s2 + $0x8] sm:$0xff]
    %v50 = vld [vmem:[%s2 + $0x10] sm:$0xff]
    %v51 = vld [vmem:[%s2 + $0x18] sm:$0xff]
    %v52 = vld [vmem:[%s2 + $0x20] sm:$0x1f]
    %v53 = vld [vmem:[%s2 + $0x28] sm:$0x1f]
    %v54 = vld [vmem:[%s4] sm:$0xff]
    %v55 = vld [vmem:[%s4 + $0x8] sm:$0xff]
    %v56 = vld [vmem:[%s4 + $0x10] sm:$0xff]
    %v57 = vld [vmem:[%s4 + $0x18] sm:$0xff]
    %59 = vset.pattern.permute.xlu0 0
    %60 = vperm.xlu0 %59, %v54
    %v61 = vpop.permute.xlu0 %60
    %64 = vset.pattern.permute.xlu0 0
    %65 = vperm.xlu0 %64, %v55
    %v66 = vpop.permute.xlu0 %65
    %69 = vset.pattern.permute.xlu0 0
    %70 = vperm.xlu0 %69, %v56
    %v71 = vpop.permute.xlu0 %70
    %74 = vset.pattern.permute.xlu0 0
    %75 = vperm.xlu0 %74, %v57
    %v76 = vpop.permute.xlu0 %75
    %vm78 = vcmask 171008
    %v80 = vsel %vm78, %v44, 0
    %v83 = vsel %vm78, %v45, 0
    %v86 = vsel %vm78, %v46, 0
    %v89 = vsel %vm78, %v47, 0
    %vm91 = vcmask 1044480
    %v93 = vsel %vm91, %v52, 0
    %v96 = vsel %vm91, %v53, 0
    %98 = vmatprep.subr.mxu0 %v49
    %99 = vmatpush1.msra.mxu0 %v48
    %100 = vmatprep.subr.mxu0 %v51
    %101 = vmatpush1.msra.mxu0 %v50
    %102 = vmatprep.subr.mxu0 %v96
    %103 = vmatpush1.msra.mxu0 %v93
    %104 = vmatprep.subr.mxu0 0.0
    %105 = vmatpush1.msra.mxu0 0.0
    %106 = vmatprep.subr.mxu0 0.0
    %107 = vmatpush1.msra.mxu0 0.0
    %108 = vmatprep.subr.mxu0 0.0
    %109 = vmatpush1.msra.mxu0 0.0
    %110 = vmatprep.subr.mxu0 0.0
    %111 = vmatpush1.msra.mxu0 0.0
    %112 = vmatprep.subr.mxu0 0.0
    %113 = vmatpush1.msra.mxu0 0.0
    %114 = vmatprep.subr.mxu0 0.0
    %115 = vmatpush1.msra.mxu0 0.0
    %116 = vmatprep.subr.mxu0 0.0
    %117 = vmatpush1.msra.mxu0 0.0
    %118 = vmatprep.subr.mxu0 0.0
    %119 = vmatpush1.msra.mxu0 0.0
    %120 = vmatprep.subr.mxu0 0.0
    %121 = vmatpush1.msra.mxu0 0.0
    %122 = vmatprep.subr.mxu0 0.0
    %123 = vmatpush1.msra.mxu0 0.0
    %124 = vmatprep.subr.mxu0 0.0
    %125 = vmatpush1.msra.mxu0 0.0
    %126 = vmatprep.subr.mxu0 0.0
    %127 = vmatpush1.msra.mxu0 0.0
    %128 = vmatprep.subr.mxu0 0.0
    %129 = vmatpush1.msra.mxu0 0.0
    %130 = vmatprep.subr.mxu0 0.0
    %131 = vmatpush1.msra.mxu0 0.0
    %132 = vmatprep.subr.mxu0 0.0
    %133 = vmatpush1.msra.mxu0 0.0
    %134 = vmatprep.subr.mxu0 0.0
    %135 = vmatpush1.msra.mxu0 0.0
    %136 = vmatprep.subr.mxu0 0.0
    %137 = vmatpush1.msra.mxu0 0.0
    %138 = vmatprep.subr.mxu0 0.0
    %139 = vmatpush1.msra.mxu0 0.0
    %140 = vmatprep.subr.mxu0 0.0
    %141 = vmatpush1.msra.mxu0 0.0
    %142 = vmatprep.subr.mxu0 0.0
    %143 = vmatpush1.msra.mxu0 0.0
    %144 = vmatprep.subr.mxu0 0.0
    %145 = vmatpush1.msra.mxu0 0.0
    %146 = vmatprep.subr.mxu0 0.0
    %147 = vmatpush1.msra.mxu0 0.0
    %148 = vmatprep.subr.mxu0 0.0
    %149 = vmatpush1.msra.mxu0 0.0
    %150 = vmatprep.subr.mxu0 0.0
    %151 = vmatpush1.msra.mxu0 0.0
    %152 = vmatprep.subr.mxu0 0.0
    %153 = vmatpush1.msra.mxu0 0.0
    %154 = vmatprep.subr.mxu0 0.0
    %155 = vmatpush1.msra.mxu0 0.0
    %156 = vmatprep.subr.mxu0 0.0
    %157 = vmatpush1.msra.mxu0 0.0
    %158 = vmatprep.subr.mxu0 0.0
    %159 = vmatpush1.msra.mxu0 0.0
    %160 = vmatprep.subr.mxu0 0.0
    %161 = vmatpush1.msra.mxu0 0.0
    %162 = vmatprep.mubr.f32.mxu0 0.0
    %163 = vmatmul.mubr.f32.gmra.mrb[0].mxu0 %v80
    %v164 = vpop.f32.mrb[0].mxu0
    %v165 = vadd.f32 %v61, %v164
    %v166 = vpop.f32.mrb[0].mxu0
    %v167 = vadd.f32 %v61, %v166
    %168 = vmatprep.mubr.f32.mxu0 0.0
    %169 = vmatmul.mubr.f32.gmra.mrb[0].mxu0 %v83
    %v170 = vpop.f32.mrb[0].mxu0
    %v171 = vadd.f32 %v66, %v170
    %v172 = vpop.f32.mrb[0].mxu0
    %v173 = vadd.f32 %v66, %v172
    %174 = vmatprep.mubr.f32.mxu0 0.0
    %175 = vmatmul.mubr.f32.gmra.mrb[0].mxu0 %v86
    %v176 = vpop.f32.mrb[0].mxu0
    %v177 = vadd.f32 %v71, %v176
    %v178 = vpop.f32.mrb[0].mxu0
    %v179 = vadd.f32 %v71, %v178
    %180 = vmatprep.mubr.f32.mxu0 0.0
    %181 = vmatmul.mubr.f32.gmra.mrb[0].mxu0 %v89
    %v182 = vpop.f32.mrb[0].mxu0
    %v183 = vadd.f32 %v76, %v182
    %v184 = vpop.f32.mrb[0].mxu0
    %v185 = vadd.f32 %v76, %v184
    %186 = vdwg.mxu0
    %v187 = vtanh.pop %v165
    %v188 = vtanh.pop %v167
    %v189 = vtanh.pop %v171
    %v190 = vtanh.pop %v173
    %v191 = vtanh.pop %v177
    %v192 = vtanh.pop %v179
    %v193 = vtanh.pop %v183
    %v194 = vtanh.pop %v185
    %v195 = vld [vmem:[%s5] sm:$0xff]
    %v196 = vld [vmem:[%s5 + $0x8] sm:$0xff]
    %v197 = vld [vmem:[%s5 + $0x10] sm:$0xff]
    %v198 = vld [vmem:[%s5 + $0x18] sm:$0xff]
    %v199 = vld [vmem:[%s6] sm:$0xff]
    %v200 = vld [vmem:[%s6 + $0x8] sm:$0xff]
    %v201 = vld [vmem:[%s6 + $0x10] sm:$0xff]
    %v202 = vld [vmem:[%s6 + $0x18] sm:$0xff]
    %204 = vset.pattern.permute.xlu0 0
    %205 = vperm.xlu0 %204, %v199
    %v206 = vpop.permute.xlu0 %205
    %209 = vset.pattern.permute.xlu0 0
    %210 = vperm.xlu0 %209, %v200
    %v211 = vpop.permute.xlu0 %210
    %214 = vset.pattern.permute.xlu0 0
    %215 = vperm.xlu0 %214, %v201
    %v216 = vpop.permute.xlu0 %215
    %219 = vset.pattern.permute.xlu0 0
    %220 = vperm.xlu0 %219, %v202
    %v221 = vpop.permute.xlu0 %220
    %v223 = vld [vmem:[%s7] sm:$0x1]
    %s224 = sld [smem:[#allocation2]]
    %v225 = vstv %s224
    %vm226 = vcmask 261120
    %v228 = vsel %vm226, %v223, 0
    %230 = vmatprep.subr.mxu0 %v188
    %231 = vmatpush1.msra.mxu0 %v187
    %232 = vmatprep.subr.mxu0 %v190
    %233 = vmatpush1.msra.mxu0 %v189
    %234 = vmatprep.subr.mxu0 %v192
    %235 = vmatpush1.msra.mxu0 %v191
    %236 = vmatprep.subr.mxu0 %v194
    %237 = vmatpush1.msra.mxu0 %v193
    %238 = vmatprep.subr.mxu0 0.0
    %239 = vmatpush1.msra.mxu0 0.0
    %240 = vmatprep.subr.mxu0 0.0
    %241 = vmatpush1.msra.mxu0 0.0
    %242 = vmatprep.subr.mxu0 0.0
    %243 = vmatpush1.msra.mxu0 0.0
    %244 = vmatprep.subr.mxu0 0.0
    %245 = vmatpush1.msra.mxu0 0.0
    %246 = vmatprep.subr.mxu0 0.0
    %247 = vmatpush1.msra.mxu0 0.0
    %248 = vmatprep.subr.mxu0 0.0
    %249 = vmatpush1.msra.mxu0 0.0
    %250 = vmatprep.subr.mxu0 0.0
    %251 = vmatpush1.msra.mxu0 0.0
    %252 = vmatprep.subr.mxu0 0.0
    %253 = vmatpush1.msra.mxu0 0.0
    %254 = vmatprep.subr.mxu0 0.0
    %255 = vmatpush1.msra.mxu0 0.0
    %256 = vmatprep.subr.mxu0 0.0
    %257 = vmatpush1.msra.mxu0 0.0
    %258 = vmatprep.subr.mxu0 0.0
    %259 = vmatpush1.msra.mxu0 0.0
    %260 = vmatprep.subr.mxu0 0.0
    %261 = vmatpush1.msra.mxu0 0.0
    %262 = vmatprep.subr.mxu0 0.0
    %263 = vmatpush1.msra.mxu0 0.0
    %264 = vmatprep.subr.mxu0 0.0
    %265 = vmatpush1.msra.mxu0 0.0
    %266 = vmatprep.subr.mxu0 0.0
    %267 = vmatpush1.msra.mxu0 0.0
    %268 = vmatprep.subr.mxu0 0.0
    %269 = vmatpush1.msra.mxu0 0.0
    %270 = vmatprep.subr.mxu0 0.0
    %271 = vmatpush1.msra.mxu0 0.0
    %272 = vmatprep.subr.mxu0 0.0
    %273 = vmatpush1.msra.mxu0 0.0
    %274 = vmatprep.subr.mxu0 0.0
    %275 = vmatpush1.msra.mxu0 0.0
    %276 = vmatprep.subr.mxu0 0.0
    %277 = vmatpush1.msra.mxu0 0.0
    %278 = vmatprep.subr.mxu0 0.0
    %279 = vmatpush1.msra.mxu0 0.0
    %280 = vmatprep.subr.mxu0 0.0
    %281 = vmatpush1.msra.mxu0 0.0
    %282 = vmatprep.subr.mxu0 0.0
    %283 = vmatpush1.msra.mxu0 0.0
    %284 = vmatprep.subr.mxu0 0.0
    %285 = vmatpush1.msra.mxu0 0.0
    %286 = vmatprep.subr.mxu0 0.0
    %287 = vmatpush1.msra.mxu0 0.0
    %288 = vmatprep.subr.mxu0 0.0
    %289 = vmatpush1.msra.mxu0 0.0
    %290 = vmatprep.subr.mxu0 0.0
    %291 = vmatpush1.msra.mxu0 0.0
    %292 = vmatprep.subr.mxu0 0.0
    %293 = vmatpush1.msra.mxu0 0.0
    %294 = vmatprep.mubr.f32.mxu0 0.0
    %295 = vmatmul.mubr.f32.gmra.mrb[0].mxu0 %v228
    %v296 = vpop.f32.mrb[0].mxu0
    %v297 = vadd.f32 %v225, %v296
    %v298 = vpop.f32.mrb[0].mxu0
    %v299 = vadd.f32 %v225, %v298
    %300 = vdwg.mxu0
    %v303 = vcombine.low %v297, %v299
    %v305 = vunpack.c.l.s4 1966171168
    %v306 = vunpack.c.0.s8 %v305
    %v307 = vlaneseq
    %v308 = vshrl.u32 %v307, 7
    %v309 = vsub.s32 %v306, %v308
    %v310 = vrot.slane %v303, %v309
    %v312 = vunpack.c.l.s4 1966171168
    %v313 = vunpack.c.0.s8 %v312
    %v314 = vlaneseq
    %v315 = vshrl.u32 %v314, 7
    %v316 = vsub.s32 %v313, %v315
    %v317 = vrot.slane %v310, %v316
    %v319 = vlaneseq
    %vm320 = vcmp.ge.s32.totalorder %v319, 0
    %vm321 = vcmp.lt.s32.totalorder %v319, 256
    %vm322 = vmand %vm320, %vm321
    %323 = vst.msk [vmem:[#allocation6] ss:$8 sm:$0x3] %vm322, %v317
    %324 = vst.msk [vmem:[#allocation6] ss:$8 sm:$0x0] %vm322, %v317
    %s325 = sld [smem:[#allocation3 + $0x1]]
    %s326 = sld [smem:[#allocation3]]
    %s327 = ssub.f32 %s325, %s326
    %v329 = vsel %vm226, %v195, 0
    %v332 = vsel %vm226, %v196, 0
    %v335 = vsel %vm226, %v197, 0
    %v338 = vsel %vm226, %v198, 0
    %340 = vmatprep.subr.mxu0 %v188
    %341 = vmatpush1.msra.mxu0 %v187
    %342 = vmatprep.subr.mxu0 %v190
    %343 = vmatpush1.msra.mxu0 %v189
    %344 = vmatprep.subr.mxu0 %v192
    %345 = vmatpush1.msra.mxu0 %v191
    %346 = vmatprep.subr.mxu0 %v194
    %347 = vmatpush1.msra.mxu0 %v193
    %348 = vmatprep.subr.mxu0 0.0
    %349 = vmatpush1.msra.mxu0 0.0
    %350 = vmatprep.subr.mxu0 0.0
    %351 = vmatpush1.msra.mxu0 0.0
    %352 = vmatprep.subr.mxu0 0.0
    %353 = vmatpush1.msra.mxu0 0.0
    %354 = vmatprep.subr.mxu0 0.0
    %355 = vmatpush1.msra.mxu0 0.0
    %356 = vmatprep.subr.mxu0 0.0
    %357 = vmatpush1.msra.mxu0 0.0
    %358 = vmatprep.subr.mxu0 0.0
    %359 = vmatpush1.msra.mxu0 0.0
    %360 = vmatprep.subr.mxu0 0.0
    %361 = vmatpush1.msra.mxu0 0.0
    %362 = vmatprep.subr.mxu0 0.0
    %363 = vmatpush1.msra.mxu0 0.0
    %364 = vmatprep.subr.mxu0 0.0
    %365 = vmatpush1.msra.mxu0 0.0
    %366 = vmatprep.subr.mxu0 0.0
    %367 = vmatpush1.msra.mxu0 0.0
    %368 = vmatprep.subr.mxu0 0.0
    %369 = vmatpush1.msra.mxu0 0.0
    %370 = vmatprep.subr.mxu0 0.0
    %371 = vmatpush1.msra.mxu0 0.0
    %372 = vmatprep.subr.mxu0 0.0
    %373 = vmatpush1.msra.mxu0 0.0
    %374 = vmatprep.subr.mxu0 0.0
    %375 = vmatpush1.msra.mxu0 0.0
    %376 = vmatprep.subr.mxu0 0.0
    %377 = vmatpush1.msra.mxu0 0.0
    %378 = vmatprep.subr.mxu0 0.0
    %379 = vmatpush1.msra.mxu0 0.0
    %380 = vmatprep.subr.mxu0 0.0
    %381 = vmatpush1.msra.mxu0 0.0
    %382 = vmatprep.subr.mxu0 0.0
    %383 = vmatpush1.msra.mxu0 0.0
    %384 = vmatprep.subr.mxu0 0.0
    %385 = vmatpush1.msra.mxu0 0.0
    %386 = vmatprep.subr.mxu0 0.0
    %387 = vmatpush1.msra.mxu0 0.0
    %388 = vmatprep.subr.mxu0 0.0
    %389 = vmatpush1.msra.mxu0 0.0
    %390 = vmatprep.subr.mxu0 0.0
    %391 = vmatpush1.msra.mxu0 0.0
    %392 = vmatprep.subr.mxu0 0.0
    %393 = vmatpush1.msra.mxu0 0.0
    %394 = vmatprep.subr.mxu0 0.0
    %395 = vmatpush1.msra.mxu0 0.0
    %396 = vmatprep.subr.mxu0 0.0
    %397 = vmatpush1.msra.mxu0 0.0
    %398 = vmatprep.subr.mxu0 0.0
    %399 = vmatpush1.msra.mxu0 0.0
    %400 = vmatprep.subr.mxu0 0.0
    %401 = vmatpush1.msra.mxu0 0.0
    %402 = vmatprep.subr.mxu0 0.0
    %403 = vmatpush1.msra.mxu0 0.0
    %404 = vmatprep.mubr.f32.mxu0 0.0
    %405 = vmatmul.mubr.f32.gmra.mrb[0].mxu0 %v329
    %v406 = vpop.f32.mrb[0].mxu0
    %v407 = vadd.f32 %v206, %v406
    %v408 = vpop.f32.mrb[0].mxu0
    %v409 = vadd.f32 %v206, %v408
    %410 = vmatprep.mubr.f32.mxu0 0.0
    %411 = vmatmul.mubr.f32.gmra.mrb[0].mxu0 %v332
    %v412 = vpop.f32.mrb[0].mxu0
    %v413 = vadd.f32 %v211, %v412
    %v414 = vpop.f32.mrb[0].mxu0
    %v415 = vadd.f32 %v211, %v414
    %416 = vmatprep.mubr.f32.mxu0 0.0
    %417 = vmatmul.mubr.f32.gmra.mrb[0].mxu0 %v335
    %v418 = vpop.f32.mrb[0].mxu0
    %v419 = vadd.f32 %v216, %v418
    %v420 = vpop.f32.mrb[0].mxu0
    %v421 = vadd.f32 %v216, %v420
    %422 = vmatprep.mubr.f32.mxu0 0.0
    %423 = vmatmul.mubr.f32.gmra.mrb[0].mxu0 %v338
    %v424 = vpop.f32.mrb[0].mxu0
    %v425 = vadd.f32 %v221, %v424
    %v426 = vpop.f32.mrb[0].mxu0
    %v427 = vadd.f32 %v221, %v426
    %428 = vdwg.mxu0
    %v429 = vtanh.pop %v407
    %v430 = vtanh.pop %v409
    %v431 = vtanh.pop %v413
    %v432 = vtanh.pop %v415
    %v433 = vtanh.pop %v419
    %v434 = vtanh.pop %v421
    %v435 = vtanh.pop %v425
    %v436 = vtanh.pop %v427
    %v437 = vstv %s327
    %v438 = vmul.f32 %v437, %v429
    %v439 = vmul.f32 %v437, %v430
    %v440 = vmul.f32 %v437, %v431
    %v441 = vmul.f32 %v437, %v432
    %v442 = vmul.f32 %v437, %v433
    %v443 = vmul.f32 %v437, %v434
    %v444 = vmul.f32 %v437, %v435
    %v445 = vmul.f32 %v437, %v436
    %v446 = vadd.f32 %v187, %v438
    %v447 = vadd.f32 %v188, %v439
    %v448 = vadd.f32 %v189, %v440
    %v449 = vadd.f32 %v190, %v441
    %v450 = vadd.f32 %v191, %v442
    %v451 = vadd.f32 %v192, %v443
    %v452 = vadd.f32 %v193, %v444
    %v453 = vadd.f32 %v194, %v445
    %454 = vmatprep.subr.mxu0 %v447
    %455 = vmatpush1.msra.mxu0 %v446
    %456 = vmatprep.subr.mxu0 %v449
    %457 = vmatpush1.msra.mxu0 %v448
    %458 = vmatprep.subr.mxu0 %v451
    %459 = vmatpush1.msra.mxu0 %v450
    %460 = vmatprep.subr.mxu0 %v453
    %461 = vmatpush1.msra.mxu0 %v452
    %462 = vmatprep.subr.mxu0 0.0
    %463 = vmatpush1.msra.mxu0 0.0
    %464 = vmatprep.subr.mxu0 0.0
    %465 = vmatpush1.msra.mxu0 0.0
    %466 = vmatprep.subr.mxu0 0.0
    %467 = vmatpush1.msra.mxu0 0.0
    %468 = vmatprep.subr.mxu0 0.0
    %469 = vmatpush1.msra.mxu0 0.0
    %470 = vmatprep.subr.mxu0 0.0
    %471 = vmatpush1.msra.mxu0 0.0
    %472 = vmatprep.subr.mxu0 0.0
    %473 = vmatpush1.msra.mxu0 0.0
    %474 = vmatprep.subr.mxu0 0.0
    %475 = vmatpush1.msra.mxu0 0.0
    %476 = vmatprep.subr.mxu0 0.0
    %477 = vmatpush1.msra.mxu0 0.0
    %478 = vmatprep.subr.mxu0 0.0
    %479 = vmatpush1.msra.mxu0 0.0
    %480 = vmatprep.subr.mxu0 0.0
    %481 = vmatpush1.msra.mxu0 0.0
    %482 = vmatprep.subr.mxu0 0.0
    %483 = vmatpush1.msra.mxu0 0.0
    %484 = vmatprep.subr.mxu0 0.0
    %485 = vmatpush1.msra.mxu0 0.0
    %486 = vmatprep.subr.mxu0 0.0
    %487 = vmatpush1.msra.mxu0 0.0
    %488 = vmatprep.subr.mxu0 0.0
    %489 = vmatpush1.msra.mxu0 0.0
    %490 = vmatprep.subr.mxu0 0.0
    %491 = vmatpush1.msra.mxu0 0.0
    %492 = vmatprep.subr.mxu0 0.0
    %493 = vmatpush1.msra.mxu0 0.0
    %494 = vmatprep.subr.mxu0 0.0
    %495 = vmatpush1.msra.mxu0 0.0
    %496 = vmatprep.subr.mxu0 0.0
    %497 = vmatpush1.msra.mxu0 0.0
    %498 = vmatprep.subr.mxu0 0.0
    %499 = vmatpush1.msra.mxu0 0.0
    %500 = vmatprep.subr.mxu0 0.0
    %501 = vmatpush1.msra.mxu0 0.0
    %502 = vmatprep.subr.mxu0 0.0
    %503 = vmatpush1.msra.mxu0 0.0
    %504 = vmatprep.subr.mxu0 0.0
    %505 = vmatpush1.msra.mxu0 0.0
    %506 = vmatprep.subr.mxu0 0.0
    %507 = vmatpush1.msra.mxu0 0.0
    %508 = vmatprep.subr.mxu0 0.0
    %509 = vmatpush1.msra.mxu0 0.0
    %510 = vmatprep.subr.mxu0 0.0
    %511 = vmatpush1.msra.mxu0 0.0
    %512 = vmatprep.subr.mxu0 0.0
    %513 = vmatpush1.msra.mxu0 0.0
    %514 = vmatprep.subr.mxu0 0.0
    %515 = vmatpush1.msra.mxu0 0.0
    %516 = vmatprep.subr.mxu0 0.0
    %517 = vmatpush1.msra.mxu0 0.0
    %518 = vmatprep.mubr.f32.mxu0 0.0
    %519 = vmatmul.mubr.f32.gmra.mrb[0].mxu0 %v228
    %v520 = vpop.f32.mrb[0].mxu0
    %v521 = vadd.f32 %v225, %v520
    %v522 = vpop.f32.mrb[0].mxu0
    %v523 = vadd.f32 %v225, %v522
    %524 = vdwg.mxu0
    %v527 = vcombine.low %v521, %v523
    %v529 = vunpack.c.l.s4 1966171168
    %v530 = vunpack.c.0.s8 %v529
    %v531 = vlaneseq
    %v532 = vshrl.u32 %v531, 7
    %v533 = vsub.s32 %v530, %v532
    %v534 = vrot.slane %v527, %v533
    %v536 = vunpack.c.l.s4 1966171168
    %v537 = vunpack.c.0.s8 %v536
    %v538 = vlaneseq
    %v539 = vshrl.u32 %v538, 7
    %v540 = vsub.s32 %v537, %v539
    %v541 = vrot.slane %v534, %v540
    %s543 = scalar_lea.vmem [#allocation6], 1
    %544 = vst.msk [vmem:[%s543] ss:$8 sm:$0x3] %vm322, %v541
    %545 = vst.msk [vmem:[%s543] ss:$8 sm:$0x0] %vm322, %v541
    %s546 = sld [smem:[#allocation3 + $0x2]]
    %s547 = sld [smem:[#allocation3 + $0x1]]
    %s548 = ssub.f32 %s546, %s547
    %549 = vmatprep.subr.mxu0 %v447
    %550 = vmatpush1.msra.mxu0 %v446
    %551 = vmatprep.subr.mxu0 %v449
    %552 = vmatpush1.msra.mxu0 %v448
    %553 = vmatprep.subr.mxu0 %v451
    %554 = vmatpush1.msra.mxu0 %v450
    %555 = vmatprep.subr.mxu0 %v453
    %556 = vmatpush1.msra.mxu0 %v452
    %557 = vmatprep.subr.mxu0 0.0
    %558 = vmatpush1.msra.mxu0 0.0
    %559 = vmatprep.subr.mxu0 0.0
    %560 = vmatpush1.msra.mxu0 0.0
    %561 = vmatprep.subr.mxu0 0.0
    %562 = vmatpush1.msra.mxu0 0.0
    %563 = vmatprep.subr.mxu0 0.0
    %564 = vmatpush1.msra.mxu0 0.0
    %565 = vmatprep.subr.mxu0 0.0
    %566 = vmatpush1.msra.mxu0 0.0
    %567 = vmatprep.subr.mxu0 0.0
    %568 = vmatpush1.msra.mxu0 0.0
    %569 = vmatprep.subr.mxu0 0.0
    %570 = vmatpush1.msra.mxu0 0.0
    %571 = vmatprep.subr.mxu0 0.0
    %572 = vmatpush1.msra.mxu0 0.0
    %573 = vmatprep.subr.mxu0 0.0
    %574 = vmatpush1.msra.mxu0 0.0
    %575 = vmatprep.subr.mxu0 0.0
    %576 = vmatpush1.msra.mxu0 0.0
    %577 = vmatprep.subr.mxu0 0.0
    %578 = vmatpush1.msra.mxu0 0.0
    %579 = vmatprep.subr.mxu0 0.0
    %580 = vmatpush1.msra.mxu0 0.0
    %581 = vmatprep.subr.mxu0 0.0
    %582 = vmatpush1.msra.mxu0 0.0
    %583 = vmatprep.subr.mxu0 0.0
    %584 = vmatpush1.msra.mxu0 0.0
    %585 = vmatprep.subr.mxu0 0.0
    %586 = vmatpush1.msra.mxu0 0.0
    %587 = vmatprep.subr.mxu0 0.0
    %588 = vmatpush1.msra.mxu0 0.0
    %589 = vmatprep.subr.mxu0 0.0
    %590 = vmatpush1.msra.mxu0 0.0
    %591 = vmatprep.subr.mxu0 0.0
    %592 = vmatpush1.msra.mxu0 0.0
    %593 = vmatprep.subr.mxu0 0.0
    %594 = vmatpush1.msra.mxu0 0.0
    %595 = vmatprep.subr.mxu0 0.0
    %596 = vmatpush1.msra.mxu0 0.0
    %597 = vmatprep.subr.mxu0 0.0
    %598 = vmatpush1.msra.mxu0 0.0
    %599 = vmatprep.subr.mxu0 0.0
    %600 = vmatpush1.msra.mxu0 0.0
    %601 = vmatprep.subr.mxu0 0.0
    %602 = vmatpush1.msra.mxu0 0.0
    %603 = vmatprep.subr.mxu0 0.0
    %604 = vmatpush1.msra.mxu0 0.0
    %605 = vmatprep.subr.mxu0 0.0
    %606 = vmatpush1.msra.mxu0 0.0
    %607 = vmatprep.subr.mxu0 0.0
    %608 = vmatpush1.msra.mxu0 0.0
    %609 = vmatprep.subr.mxu0 0.0
    %610 = vmatpush1.msra.mxu0 0.0
    %611 = vmatprep.subr.mxu0 0.0
    %612 = vmatpush1.msra.mxu0 0.0
    %613 = vmatprep.mubr.f32.mxu0 0.0
    %614 = vmatmul.mubr.f32.gmra.mrb[0].mxu0 %v329
    %v615 = vpop.f32.mrb[0].mxu0
    %v616 = vadd.f32 %v206, %v615
    %v617 = vpop.f32.mrb[0].mxu0
    %v618 = vadd.f32 %v206, %v617
    %619 = vmatprep.mubr.f32.mxu0 0.0
    %620 = vmatmul.mubr.f32.gmra.mrb[0].mxu0 %v332
    %v621 = vpop.f32.mrb[0].mxu0
    %v622 = vadd.f32 %v211, %v621
    %v623 = vpop.f32.mrb[0].mxu0
    %v624 = vadd.f32 %v211, %v623
    %625 = vmatprep.mubr.f32.mxu0 0.0
    %626 = vmatmul.mubr.f32.gmra.mrb[0].mxu0 %v335
    %v627 = vpop.f32.mrb[0].mxu0
    %v628 = vadd.f32 %v216, %v627
    %v629 = vpop.f32.mrb[0].mxu0
    %v630 = vadd.f32 %v216, %v629
    %631 = vmatprep.mubr.f32.mxu0 0.0
    %632 = vmatmul.mubr.f32.gmra.mrb[0].mxu0 %v338
    %v633 = vpop.f32.mrb[0].mxu0
    %v634 = vadd.f32 %v221, %v633
    %v635 = vpop.f32.mrb[0].mxu0
    %v636 = vadd.f32 %v221, %v635
    %637 = vdwg.mxu0
    %v638 = vtanh.pop %v616
    %v639 = vtanh.pop %v618
    %v640 = vtanh.pop %v622
    %v641 = vtanh.pop %v624
    %v642 = vtanh.pop %v628
    %v643 = vtanh.pop %v630
    %v644 = vtanh.pop %v634
    %v645 = vtanh.pop %v636
    %v646 = vstv %s548
    %v647 = vmul.f32 %v646, %v638
    %v648 = vmul.f32 %v646, %v639
    %v649 = vmul.f32 %v646, %v640
    %v650 = vmul.f32 %v646, %v641
    %v651 = vmul.f32 %v646, %v642
    %v652 = vmul.f32 %v646, %v643
    %v653 = vmul.f32 %v646, %v644
    %v654 = vmul.f32 %v646, %v645
    %v655 = vadd.f32 %v446, %v647
    %v656 = vadd.f32 %v447, %v648
    %v657 = vadd.f32 %v448, %v649
    %v658 = vadd.f32 %v449, %v650
    %v659 = vadd.f32 %v450, %v651
    %v660 = vadd.f32 %v451, %v652
    %v661 = vadd.f32 %v452, %v653
    %v662 = vadd.f32 %v453, %v654
    %663 = vmatprep.subr.mxu0 %v656
    %664 = vmatpush1.msra.mxu0 %v655
    %665 = vmatprep.subr.mxu0 %v658
    %666 = vmatpush1.msra.mxu0 %v657
    %667 = vmatprep.subr.mxu0 %v660
    %668 = vmatpush1.msra.mxu0 %v659
    %669 = vmatprep.subr.mxu0 %v662
    %670 = vmatpush1.msra.mxu0 %v661
    %671 = vmatprep.subr.mxu0 0.0
    %672 = vmatpush1.msra.mxu0 0.0
    %673 = vmatprep.subr.mxu0 0.0
    %674 = vmatpush1.msra.mxu0 0.0
    %675 = vmatprep.subr.mxu0 0.0
    %676 = vmatpush1.msra.mxu0 0.0
    %677 = vmatprep.subr.mxu0 0.0
    %678 = vmatpush1.msra.mxu0 0.0
    %679 = vmatprep.subr.mxu0 0.0
    %680 = vmatpush1.msra.mxu0 0.0
    %681 = vmatprep.subr.mxu0 0.0
    %682 = vmatpush1.msra.mxu0 0.0
    %683 = vmatprep.subr.mxu0 0.0
    %684 = vmatpush1.msra.mxu0 0.0
    %685 = vmatprep.subr.mxu0 0.0
    %686 = vmatpush1.msra.mxu0 0.0
    %687 = vmatprep.subr.mxu0 0.0
    %688 = vmatpush1.msra.mxu0 0.0
    %689 = vmatprep.subr.mxu0 0.0
    %690 = vmatpush1.msra.mxu0 0.0
    %691 = vmatprep.subr.mxu0 0.0
    %692 = vmatpush1.msra.mxu0 0.0
    %693 = vmatprep.subr.mxu0 0.0
    %694 = vmatpush1.msra.mxu0 0.0
    %695 = vmatprep.subr.mxu0 0.0
    %696 = vmatpush1.msra.mxu0 0.0
    %697 = vmatprep.subr.mxu0 0.0
    %698 = vmatpush1.msra.mxu0 0.0
    %699 = vmatprep.subr.mxu0 0.0
    %700 = vmatpush1.msra.mxu0 0.0
    %701 = vmatprep.subr.mxu0 0.0
    %702 = vmatpush1.msra.mxu0 0.0
    %703 = vmatprep.subr.mxu0 0.0
    %704 = vmatpush1.msra.mxu0 0.0
    %705 = vmatprep.subr.mxu0 0.0
    %706 = vmatpush1.msra.mxu0 0.0
    %707 = vmatprep.subr.mxu0 0.0
    %708 = vmatpush1.msra.mxu0 0.0
    %709 = vmatprep.subr.mxu0 0.0
    %710 = vmatpush1.msra.mxu0 0.0
    %711 = vmatprep.subr.mxu0 0.0
    %712 = vmatpush1.msra.mxu0 0.0
    %713 = vmatprep.subr.mxu0 0.0
    %714 = vmatpush1.msra.mxu0 0.0
    %715 = vmatprep.subr.mxu0 0.0
    %716 = vmatpush1.msra.mxu0 0.0
    %717 = vmatprep.subr.mxu0 0.0
    %718 = vmatpush1.msra.mxu0 0.0
    %719 = vmatprep.subr.mxu0 0.0
    %720 = vmatpush1.msra.mxu0 0.0
    %721 = vmatprep.subr.mxu0 0.0
    %722 = vmatpush1.msra.mxu0 0.0
    %723 = vmatprep.subr.mxu0 0.0
    %724 = vmatpush1.msra.mxu0 0.0
    %725 = vmatprep.subr.mxu0 0.0
    %726 = vmatpush1.msra.mxu0 0.0
    %727 = vmatprep.mubr.f32.mxu0 0.0
    %728 = vmatmul.mubr.f32.gmra.mrb[0].mxu0 %v228
    %v729 = vpop.f32.mrb[0].mxu0
    %v730 = vadd.f32 %v225, %v729
    %v731 = vpop.f32.mrb[0].mxu0
    %v732 = vadd.f32 %v225, %v731
    %733 = vdwg.mxu0
    %v736 = vcombine.low %v730, %v732
    %v738 = vunpack.c.l.s4 1966171168
    %v739 = vunpack.c.0.s8 %v738
    %v740 = vlaneseq
    %v741 = vshrl.u32 %v740, 7
    %v742 = vsub.s32 %v739, %v741
    %v743 = vrot.slane %v736, %v742
    %v745 = vunpack.c.l.s4 1966171168
    %v746 = vunpack.c.0.s8 %v745
    %v747 = vlaneseq
    %v748 = vshrl.u32 %v747, 7
    %v749 = vsub.s32 %v746, %v748
    %v750 = vrot.slane %v743, %v749
    %s752 = scalar_lea.vmem [#allocation6], 2
    %753 = vst.msk [vmem:[%s752] ss:$8 sm:$0x3] %vm322, %v750
    %754 = vst.msk [vmem:[%s752] ss:$8 sm:$0x0] %vm322, %v750
    %s755 = sld [smem:[#allocation3 + $0x3]]
    %s756 = sld [smem:[#allocation3 + $0x2]]
    %s757 = ssub.f32 %s755, %s756
    %758 = vmatprep.subr.mxu0 %v656
    %759 = vmatpush1.msra.mxu0 %v655
    %760 = vmatprep.subr.mxu0 %v658
    %761 = vmatpush1.msra.mxu0 %v657
    %762 = vmatprep.subr.mxu0 %v660
    %763 = vmatpush1.msra.mxu0 %v659
    %764 = vmatprep.subr.mxu0 %v662
    %765 = vmatpush1.msra.mxu0 %v661
    %766 = vmatprep.subr.mxu0 0.0
    %767 = vmatpush1.msra.mxu0 0.0
    %768 = vmatprep.subr.mxu0 0.0
    %769 = vmatpush1.msra.mxu0 0.0
    %770 = vmatprep.subr.mxu0 0.0
    %771 = vmatpush1.msra.mxu0 0.0
    %772 = vmatprep.subr.mxu0 0.0
    %773 = vmatpush1.msra.mxu0 0.0
    %774 = vmatprep.subr.mxu0 0.0
    %775 = vmatpush1.msra.mxu0 0.0
    %776 = vmatprep.subr.mxu0 0.0
    %777 = vmatpush1.msra.mxu0 0.0
    %778 = vmatprep.subr.mxu0 0.0
    %779 = vmatpush1.msra.mxu0 0.0
    %780 = vmatprep.subr.mxu0 0.0
    %781 = vmatpush1.msra.mxu0 0.0
    %782 = vmatprep.subr.mxu0 0.0
    %783 = vmatpush1.msra.mxu0 0.0
    %784 = vmatprep.subr.mxu0 0.0
    %785 = vmatpush1.msra.mxu0 0.0
    %786 = vmatprep.subr.mxu0 0.0
    %787 = vmatpush1.msra.mxu0 0.0
    %788 = vmatprep.subr.mxu0 0.0
    %789 = vmatpush1.msra.mxu0 0.0
    %790 = vmatprep.subr.mxu0 0.0
    %791 = vmatpush1.msra.mxu0 0.0
    %792 = vmatprep.subr.mxu0 0.0
    %793 = vmatpush1.msra.mxu0 0.0
    %794 = vmatprep.subr.mxu0 0.0
    %795 = vmatpush1.msra.mxu0 0.0
    %796 = vmatprep.subr.mxu0 0.0
    %797 = vmatpush1.msra.mxu0 0.0
    %798 = vmatprep.subr.mxu0 0.0
    %799 = vmatpush1.msra.mxu0 0.0
    %800 = vmatprep.subr.mxu0 0.0
    %801 = vmatpush1.msra.mxu0 0.0
    %802 = vmatprep.subr.mxu0 0.0
    %803 = vmatpush1.msra.mxu0 0.0
    %804 = vmatprep.subr.mxu0 0.0
    %805 = vmatpush1.msra.mxu0 0.0
    %806 = vmatprep.subr.mxu0 0.0
    %807 = vmatpush1.msra.mxu0 0.0
    %808 = vmatprep.subr.mxu0 0.0
    %809 = vmatpush1.msra.mxu0 0.0
    %810 = vmatprep.subr.mxu0 0.0
    %811 = vmatpush1.msra.mxu0 0.0
    %812 = vmatprep.subr.mxu0 0.0
    %813 = vmatpush1.msra.mxu0 0.0
    %814 = vmatprep.subr.mxu0 0.0
    %815 = vmatpush1.msra.mxu0 0.0
    %816 = vmatprep.subr.mxu0 0.0
    %817 = vmatpush1.msra.mxu0 0.0
    %818 = vmatprep.subr.mxu0 0.0
    %819 = vmatpush1.msra.mxu0 0.0
    %820 = vmatprep.subr.mxu0 0.0
    %821 = vmatpush1.msra.mxu0 0.0
    %822 = vmatprep.mubr.f32.mxu0 0.0
    %823 = vmatmul.mubr.f32.gmra.mrb[0].mxu0 %v329
    %v824 = vpop.f32.mrb[0].mxu0
    %v825 = vadd.f32 %v206, %v824
    %v826 = vpop.f32.mrb[0].mxu0
    %v827 = vadd.f32 %v206, %v826
    %828 = vmatprep.mubr.f32.mxu0 0.0
    %829 = vmatmul.mubr.f32.gmra.mrb[0].mxu0 %v332
    %v830 = vpop.f32.mrb[0].mxu0
    %v831 = vadd.f32 %v211, %v830
    %v832 = vpop.f32.mrb[0].mxu0
    %v833 = vadd.f32 %v211, %v832
    %834 = vmatprep.mubr.f32.mxu0 0.0
    %835 = vmatmul.mubr.f32.gmra.mrb[0].mxu0 %v335
    %v836 = vpop.f32.mrb[0].mxu0
    %v837 = vadd.f32 %v216, %v836
    %v838 = vpop.f32.mrb[0].mxu0
    %v839 = vadd.f32 %v216, %v838
    %840 = vmatprep.mubr.f32.mxu0 0.0
    %841 = vmatmul.mubr.f32.gmra.mrb[0].mxu0 %v338
    %v842 = vpop.f32.mrb[0].mxu0
    %v843 = vadd.f32 %v221, %v842
    %v844 = vpop.f32.mrb[0].mxu0
    %v845 = vadd.f32 %v221, %v844
    %846 = vdwg.mxu0
    %v847 = vtanh.pop %v825
    %v848 = vtanh.pop %v827
    %v849 = vtanh.pop %v831
    %v850 = vtanh.pop %v833
    %v851 = vtanh.pop %v837
    %v852 = vtanh.pop %v839
    %v853 = vtanh.pop %v843
    %v854 = vtanh.pop %v845
    %v855 = vstv %s757
    %v856 = vmul.f32 %v855, %v847
    %v857 = vmul.f32 %v855, %v848
    %v858 = vmul.f32 %v855, %v849
    %v859 = vmul.f32 %v855, %v850
    %v860 = vmul.f32 %v855, %v851
    %v861 = vmul.f32 %v855, %v852
    %v862 = vmul.f32 %v855, %v853
    %v863 = vmul.f32 %v855, %v854
    %v864 = vadd.f32 %v655, %v856
    %v865 = vadd.f32 %v656, %v857
    %v866 = vadd.f32 %v657, %v858
    %v867 = vadd.f32 %v658, %v859
    %v868 = vadd.f32 %v659, %v860
    %v869 = vadd.f32 %v660, %v861
    %v870 = vadd.f32 %v661, %v862
    %v871 = vadd.f32 %v662, %v863
    %872 = vmatprep.subr.mxu0 %v865
    %873 = vmatpush1.msra.mxu0 %v864
    %874 = vmatprep.subr.mxu0 %v867
    %875 = vmatpush1.msra.mxu0 %v866
    %876 = vmatprep.subr.mxu0 %v869
    %877 = vmatpush1.msra.mxu0 %v868
    %878 = vmatprep.subr.mxu0 %v871
    %879 = vmatpush1.msra.mxu0 %v870
    %880 = vmatprep.subr.mxu0 0.0
    %881 = vmatpush1.msra.mxu0 0.0
    %882 = vmatprep.subr.mxu0 0.0
    %883 = vmatpush1.msra.mxu0 0.0
    %884 = vmatprep.subr.mxu0 0.0
    %885 = vmatpush1.msra.mxu0 0.0
    %886 = vmatprep.subr.mxu0 0.0
    %887 = vmatpush1.msra.mxu0 0.0
    %888 = vmatprep.subr.mxu0 0.0
    %889 = vmatpush1.msra.mxu0 0.0
    %890 = vmatprep.subr.mxu0 0.0
    %891 = vmatpush1.msra.mxu0 0.0
    %892 = vmatprep.subr.mxu0 0.0
    %893 = vmatpush1.msra.mxu0 0.0
    %894 = vmatprep.subr.mxu0 0.0
    %895 = vmatpush1.msra.mxu0 0.0
    %896 = vmatprep.subr.mxu0 0.0
    %897 = vmatpush1.msra.mxu0 0.0
    %898 = vmatprep.subr.mxu0 0.0
    %899 = vmatpush1.msra.mxu0 0.0
    %900 = vmatprep.subr.mxu0 0.0
    %901 = vmatpush1.msra.mxu0 0.0
    %902 = vmatprep.subr.mxu0 0.0
    %903 = vmatpush1.msra.mxu0 0.0
    %904 = vmatprep.subr.mxu0 0.0
    %905 = vmatpush1.msra.mxu0 0.0
    %906 = vmatprep.subr.mxu0 0.0
    %907 = vmatpush1.msra.mxu0 0.0
    %908 = vmatprep.subr.mxu0 0.0
    %909 = vmatpush1.msra.mxu0 0.0
    %910 = vmatprep.subr.mxu0 0.0
    %911 = vmatpush1.msra.mxu0 0.0
    %912 = vmatprep.subr.mxu0 0.0
    %913 = vmatpush1.msra.mxu0 0.0
    %914 = vmatprep.subr.mxu0 0.0
    %915 = vmatpush1.msra.mxu0 0.0
    %916 = vmatprep.subr.mxu0 0.0
    %917 = vmatpush1.msra.mxu0 0.0
    %918 = vmatprep.subr.mxu0 0.0
    %919 = vmatpush1.msra.mxu0 0.0
    %920 = vmatprep.subr.mxu0 0.0
    %921 = vmatpush1.msra.mxu0 0.0
    %922 = vmatprep.subr.mxu0 0.0
    %923 = vmatpush1.msra.mxu0 0.0
    %924 = vmatprep.subr.mxu0 0.0
    %925 = vmatpush1.msra.mxu0 0.0
    %926 = vmatprep.subr.mxu0 0.0
    %927 = vmatpush1.msra.mxu0 0.0
    %928 = vmatprep.subr.mxu0 0.0
    %929 = vmatpush1.msra.mxu0 0.0
    %930 = vmatprep.subr.mxu0 0.0
    %931 = vmatpush1.msra.mxu0 0.0
    %932 = vmatprep.subr.mxu0 0.0
    %933 = vmatpush1.msra.mxu0 0.0
    %934 = vmatprep.subr.mxu0 0.0
    %935 = vmatpush1.msra.mxu0 0.0
    %936 = vmatprep.mubr.f32.mxu0 0.0
    %937 = vmatmul.mubr.f32.gmra.mrb[0].mxu0 %v228
    %v938 = vpop.f32.mrb[0].mxu0
    %v939 = vadd.f32 %v225, %v938
    %v940 = vpop.f32.mrb[0].mxu0
    %v941 = vadd.f32 %v225, %v940
    %942 = vdwg.mxu0
    %v945 = vcombine.low %v939, %v941
    %v947 = vunpack.c.l.s4 1966171168
    %v948 = vunpack.c.0.s8 %v947
    %v949 = vlaneseq
    %v950 = vshrl.u32 %v949, 7
    %v951 = vsub.s32 %v948, %v950
    %v952 = vrot.slane %v945, %v951
    %v954 = vunpack.c.l.s4 1966171168
    %v955 = vunpack.c.0.s8 %v954
    %v956 = vlaneseq
    %v957 = vshrl.u32 %v956, 7
    %v958 = vsub.s32 %v955, %v957
    %v959 = vrot.slane %v952, %v958
    %s961 = scalar_lea.vmem [#allocation6], 3
    %962 = vst.msk [vmem:[%s961] ss:$8 sm:$0x3] %vm322, %v959
    %963 = vst.msk [vmem:[%s961] ss:$8 sm:$0x0] %vm322, %v959
    %s964 = sld [smem:[#allocation3 + $0x4]]
    %s965 = sld [smem:[#allocation3 + $0x3]]
    %s966 = ssub.f32 %s964, %s965
    %967 = vmatprep.subr.mxu0 %v865
    %968 = vmatpush1.msra.mxu0 %v864
    %969 = vmatprep.subr.mxu0 %v867
    %970 = vmatpush1.msra.mxu0 %v866
    %971 = vmatprep.subr.mxu0 %v869
    %972 = vmatpush1.msra.mxu0 %v868
    %973 = vmatprep.subr.mxu0 %v871
    %974 = vmatpush1.msra.mxu0 %v870
    %975 = vmatprep.subr.mxu0 0.0
    %976 = vmatpush1.msra.mxu0 0.0
    %977 = vmatprep.subr.mxu0 0.0
    %978 = vmatpush1.msra.mxu0 0.0
    %979 = vmatprep.subr.mxu0 0.0
    %980 = vmatpush1.msra.mxu0 0.0
    %981 = vmatprep.subr.mxu0 0.0
    %982 = vmatpush1.msra.mxu0 0.0
    %983 = vmatprep.subr.mxu0 0.0
    %984 = vmatpush1.msra.mxu0 0.0
    %985 = vmatprep.subr.mxu0 0.0
    %986 = vmatpush1.msra.mxu0 0.0
    %987 = vmatprep.subr.mxu0 0.0
    %988 = vmatpush1.msra.mxu0 0.0
    %989 = vmatprep.subr.mxu0 0.0
    %990 = vmatpush1.msra.mxu0 0.0
    %991 = vmatprep.subr.mxu0 0.0
    %992 = vmatpush1.msra.mxu0 0.0
    %993 = vmatprep.subr.mxu0 0.0
    %994 = vmatpush1.msra.mxu0 0.0
    %995 = vmatprep.subr.mxu0 0.0
    %996 = vmatpush1.msra.mxu0 0.0
    %997 = vmatprep.subr.mxu0 0.0
    %998 = vmatpush1.msra.mxu0 0.0
    %999 = vmatprep.subr.mxu0 0.0
    %1000 = vmatpush1.msra.mxu0 0.0
    %1001 = vmatprep.subr.mxu0 0.0
    %1002 = vmatpush1.msra.mxu0 0.0
    %1003 = vmatprep.subr.mxu0 0.0
    %1004 = vmatpush1.msra.mxu0 0.0
    %1005 = vmatprep.subr.mxu0 0.0
    %1006 = vmatpush1.msra.mxu0 0.0
    %1007 = vmatprep.subr.mxu0 0.0
    %1008 = vmatpush1.msra.mxu0 0.0
    %1009 = vmatprep.subr.mxu0 0.0
    %1010 = vmatpush1.msra.mxu0 0.0
    %1011 = vmatprep.subr.mxu0 0.0
    %1012 = vmatpush1.msra.mxu0 0.0
    %1013 = vmatprep.subr.mxu0 0.0
    %1014 = vmatpush1.msra.mxu0 0.0
    %1015 = vmatprep.subr.mxu0 0.0
    %1016 = vmatpush1.msra.mxu0 0.0
    %1017 = vmatprep.subr.mxu0 0.0
    %1018 = vmatpush1.msra.mxu0 0.0
    %1019 = vmatprep.subr.mxu0 0.0
    %1020 = vmatpush1.msra.mxu0 0.0
    %1021 = vmatprep.subr.mxu0 0.0
    %1022 = vmatpush1.msra.mxu0 0.0
    %1023 = vmatprep.subr.mxu0 0.0
    %1024 = vmatpush1.msra.mxu0 0.0
    %1025 = vmatprep.subr.mxu0 0.0
    %1026 = vmatpush1.msra.mxu0 0.0
    %1027 = vmatprep.subr.mxu0 0.0
    %1028 = vmatpush1.msra.mxu0 0.0
    %1029 = vmatprep.subr.mxu0 0.0
    %1030 = vmatpush1.msra.mxu0 0.0
    %1031 = vmatprep.mubr.f32.mxu0 0.0
    %1032 = vmatmul.mubr.f32.gmra.mrb[0].mxu0 %v329
    %v1033 = vpop.f32.mrb[0].mxu0
    %v1034 = vadd.f32 %v206, %v1033
    %v1035 = vpop.f32.mrb[0].mxu0
    %v1036 = vadd.f32 %v206, %v1035
    %1037 = vmatprep.mubr.f32.mxu0 0.0
    %1038 = vmatmul.mubr.f32.gmra.mrb[0].mxu0 %v332
    %v1039 = vpop.f32.mrb[0].mxu0
    %v1040 = vadd.f32 %v211, %v1039
    %v1041 = vpop.f32.mrb[0].mxu0
    %v1042 = vadd.f32 %v211, %v1041
    %1043 = vmatprep.mubr.f32.mxu0 0.0
    %1044 = vmatmul.mubr.f32.gmra.mrb[0].mxu0 %v335
    %v1045 = vpop.f32.mrb[0].mxu0
    %v1046 = vadd.f32 %v216, %v1045
    %v1047 = vpop.f32.mrb[0].mxu0
    %v1048 = vadd.f32 %v216, %v1047
    %1049 = vmatprep.mubr.f32.mxu0 0.0
    %1050 = vmatmul.mubr.f32.gmra.mrb[0].mxu0 %v338
    %v1051 = vpop.f32.mrb[0].mxu0
    %v1052 = vadd.f32 %v221, %v1051
    %v1053 = vpop.f32.mrb[0].mxu0
    %v1054 = vadd.f32 %v221, %v1053
    %1055 = vdwg.mxu0
    %v1056 = vtanh.pop %v1034
    %v1057 = vtanh.pop %v1036
    %v1058 = vtanh.pop %v1040
    %v1059 = vtanh.pop %v1042
    %v1060 = vtanh.pop %v1046
    %v1061 = vtanh.pop %v1048
    %v1062 = vtanh.pop %v1052
    %v1063 = vtanh.pop %v1054
    %v1064 = vstv %s966
    %v1065 = vmul.f32 %v1064, %v1056
    %v1066 = vmul.f32 %v1064, %v1057
    %v1067 = vmul.f32 %v1064, %v1058
    %v1068 = vmul.f32 %v1064, %v1059
    %v1069 = vmul.f32 %v1064, %v1060
    %v1070 = vmul.f32 %v1064, %v1061
    %v1071 = vmul.f32 %v1064, %v1062
    %v1072 = vmul.f32 %v1064, %v1063
    %v1073 = vadd.f32 %v864, %v1065
    %v1074 = vadd.f32 %v865, %v1066
    %v1075 = vadd.f32 %v866, %v1067
    %v1076 = vadd.f32 %v867, %v1068
    %v1077 = vadd.f32 %v868, %v1069
    %v1078 = vadd.f32 %v869, %v1070
    %v1079 = vadd.f32 %v870, %v1071
    %v1080 = vadd.f32 %v871, %v1072
    %1081 = vmatprep.subr.mxu0 %v1074
    %1082 = vmatpush1.msra.mxu0 %v1073
    %1083 = vmatprep.subr.mxu0 %v1076
    %1084 = vmatpush1.msra.mxu0 %v1075
    %1085 = vmatprep.subr.mxu0 %v1078
    %1086 = vmatpush1.msra.mxu0 %v1077
    %1087 = vmatprep.subr.mxu0 %v1080
    %1088 = vmatpush1.msra.mxu0 %v1079
    %1089 = vmatprep.subr.mxu0 0.0
    %1090 = vmatpush1.msra.mxu0 0.0
    %1091 = vmatprep.subr.mxu0 0.0
    %1092 = vmatpush1.msra.mxu0 0.0
    %1093 = vmatprep.subr.mxu0 0.0
    %1094 = vmatpush1.msra.mxu0 0.0
    %1095 = vmatprep.subr.mxu0 0.0
    %1096 = vmatpush1.msra.mxu0 0.0
    %1097 = vmatprep.subr.mxu0 0.0
    %1098 = vmatpush1.msra.mxu0 0.0
    %1099 = vmatprep.subr.mxu0 0.0
    %1100 = vmatpush1.msra.mxu0 0.0
    %1101 = vmatprep.subr.mxu0 0.0
    %1102 = vmatpush1.msra.mxu0 0.0
    %1103 = vmatprep.subr.mxu0 0.0
    %1104 = vmatpush1.msra.mxu0 0.0
    %1105 = vmatprep.subr.mxu0 0.0
    %1106 = vmatpush1.msra.mxu0 0.0
    %1107 = vmatprep.subr.mxu0 0.0
    %1108 = vmatpush1.msra.mxu0 0.0
    %1109 = vmatprep.subr.mxu0 0.0
    %1110 = vmatpush1.msra.mxu0 0.0
    %1111 = vmatprep.subr.mxu0 0.0
    %1112 = vmatpush1.msra.mxu0 0.0
    %1113 = vmatprep.subr.mxu0 0.0
    %1114 = vmatpush1.msra.mxu0 0.0
    %1115 = vmatprep.subr.mxu0 0.0
    %1116 = vmatpush1.msra.mxu0 0.0
    %1117 = vmatprep.subr.mxu0 0.0
    %1118 = vmatpush1.msra.mxu0 0.0
    %1119 = vmatprep.subr.mxu0 0.0
    %1120 = vmatpush1.msra.mxu0 0.0
    %1121 = vmatprep.subr.mxu0 0.0
    %1122 = vmatpush1.msra.mxu0 0.0
    %1123 = vmatprep.subr.mxu0 0.0
    %1124 = vmatpush1.msra.mxu0 0.0
    %1125 = vmatprep.subr.mxu0 0.0
    %1126 = vmatpush1.msra.mxu0 0.0
    %1127 = vmatprep.subr.mxu0 0.0
    %1128 = vmatpush1.msra.mxu0 0.0
    %1129 = vmatprep.subr.mxu0 0.0
    %1130 = vmatpush1.msra.mxu0 0.0
    %1131 = vmatprep.subr.mxu0 0.0
    %1132 = vmatpush1.msra.mxu0 0.0
    %1133 = vmatprep.subr.mxu0 0.0
    %1134 = vmatpush1.msra.mxu0 0.0
    %1135 = vmatprep.subr.mxu0 0.0
    %1136 = vmatpush1.msra.mxu0 0.0
    %1137 = vmatprep.subr.mxu0 0.0
    %1138 = vmatpush1.msra.mxu0 0.0
    %1139 = vmatprep.subr.mxu0 0.0
    %1140 = vmatpush1.msra.mxu0 0.0
    %1141 = vmatprep.subr.mxu0 0.0
    %1142 = vmatpush1.msra.mxu0 0.0
    %1143 = vmatprep.subr.mxu0 0.0
    %1144 = vmatpush1.msra.mxu0 0.0
    %1145 = vmatprep.mubr.f32.mxu0 0.0
    %1146 = vmatmul.mubr.f32.gmra.mrb[0].mxu0 %v228
    %v1147 = vpop.f32.mrb[0].mxu0
    %v1148 = vadd.f32 %v225, %v1147
    %v1149 = vpop.f32.mrb[0].mxu0
    %v1150 = vadd.f32 %v225, %v1149
    %1151 = vdwg.mxu0
    %v1154 = vcombine.low %v1148, %v1150
    %v1156 = vunpack.c.l.s4 1966171168
    %v1157 = vunpack.c.0.s8 %v1156
    %v1158 = vlaneseq
    %v1159 = vshrl.u32 %v1158, 7
    %v1160 = vsub.s32 %v1157, %v1159
    %v1161 = vrot.slane %v1154, %v1160
    %v1163 = vunpack.c.l.s4 1966171168
    %v1164 = vunpack.c.0.s8 %v1163
    %v1165 = vlaneseq
    %v1166 = vshrl.u32 %v1165, 7
    %v1167 = vsub.s32 %v1164, %v1166
    %v1168 = vrot.slane %v1161, %v1167
    %s1170 = scalar_lea.vmem [#allocation6], 4
    %1171 = vst.msk [vmem:[%s1170] ss:$8 sm:$0x3] %vm322, %v1168
    %1172 = vst.msk [vmem:[%s1170] ss:$8 sm:$0x0] %vm322, %v1168
    %s1173 = sld [smem:[#allocation3 + $0x5]]
    %s1174 = sld [smem:[#allocation3 + $0x4]]
    %s1175 = ssub.f32 %s1173, %s1174
    %1176 = vmatprep.subr.mxu0 %v1074
    %1177 = vmatpush1.msra.mxu0 %v1073
    %1178 = vmatprep.subr.mxu0 %v1076
    %1179 = vmatpush1.msra.mxu0 %v1075
    %1180 = vmatprep.subr.mxu0 %v1078
    %1181 = vmatpush1.msra.mxu0 %v1077
    %1182 = vmatprep.subr.mxu0 %v1080
    %1183 = vmatpush1.msra.mxu0 %v1079
    %1184 = vmatprep.subr.mxu0 0.0
    %1185 = vmatpush1.msra.mxu0 0.0
    %1186 = vmatprep.subr.mxu0 0.0
    %1187 = vmatpush1.msra.mxu0 0.0
    %1188 = vmatprep.subr.mxu0 0.0
    %1189 = vmatpush1.msra.mxu0 0.0
    %1190 = vmatprep.subr.mxu0 0.0
    %1191 = vmatpush1.msra.mxu0 0.0
    %1192 = vmatprep.subr.mxu0 0.0
    %1193 = vmatpush1.msra.mxu0 0.0
    %1194 = vmatprep.subr.mxu0 0.0
    %1195 = vmatpush1.msra.mxu0 0.0
    %1196 = vmatprep.subr.mxu0 0.0
    %1197 = vmatpush1.msra.mxu0 0.0
    %1198 = vmatprep.subr.mxu0 0.0
    %1199 = vmatpush1.msra.mxu0 0.0
    %1200 = vmatprep.subr.mxu0 0.0
    %1201 = vmatpush1.msra.mxu0 0.0
    %1202 = vmatprep.subr.mxu0 0.0
    %1203 = vmatpush1.msra.mxu0 0.0
    %1204 = vmatprep.subr.mxu0 0.0
    %1205 = vmatpush1.msra.mxu0 0.0
    %1206 = vmatprep.subr.mxu0 0.0
    %1207 = vmatpush1.msra.mxu0 0.0
    %1208 = vmatprep.subr.mxu0 0.0
    %1209 = vmatpush1.msra.mxu0 0.0
    %1210 = vmatprep.subr.mxu0 0.0
    %1211 = vmatpush1.msra.mxu0 0.0
    %1212 = vmatprep.subr.mxu0 0.0
    %1213 = vmatpush1.msra.mxu0 0.0
    %1214 = vmatprep.subr.mxu0 0.0
    %1215 = vmatpush1.msra.mxu0 0.0
    %1216 = vmatprep.subr.mxu0 0.0
    %1217 = vmatpush1.msra.mxu0 0.0
    %1218 = vmatprep.subr.mxu0 0.0
    %1219 = vmatpush1.msra.mxu0 0.0
    %1220 = vmatprep.subr.mxu0 0.0
    %1221 = vmatpush1.msra.mxu0 0.0
    %1222 = vmatprep.subr.mxu0 0.0
    %1223 = vmatpush1.msra.mxu0 0.0
    %1224 = vmatprep.subr.mxu0 0.0
    %1225 = vmatpush1.msra.mxu0 0.0
    %1226 = vmatprep.subr.mxu0 0.0
    %1227 = vmatpush1.msra.mxu0 0.0
    %1228 = vmatprep.subr.mxu0 0.0
    %1229 = vmatpush1.msra.mxu0 0.0
    %1230 = vmatprep.subr.mxu0 0.0
    %1231 = vmatpush1.msra.mxu0 0.0
    %1232 = vmatprep.subr.mxu0 0.0
    %1233 = vmatpush1.msra.mxu0 0.0
    %1234 = vmatprep.subr.mxu0 0.0
    %1235 = vmatpush1.msra.mxu0 0.0
    %1236 = vmatprep.subr.mxu0 0.0
    %1237 = vmatpush1.msra.mxu0 0.0
    %1238 = vmatprep.subr.mxu0 0.0
    %1239 = vmatpush1.msra.mxu0 0.0
    %1240 = vmatprep.mubr.f32.mxu0 0.0
    %1241 = vmatmul.mubr.f32.gmra.mrb[0].mxu0 %v329
    %v1242 = vpop.f32.mrb[0].mxu0
    %v1243 = vadd.f32 %v206, %v1242
    %v1244 = vpop.f32.mrb[0].mxu0
    %v1245 = vadd.f32 %v206, %v1244
    %1246 = vmatprep.mubr.f32.mxu0 0.0
    %1247 = vmatmul.mubr.f32.gmra.mrb[0].mxu0 %v332
    %v1248 = vpop.f32.mrb[0].mxu0
    %v1249 = vadd.f32 %v211, %v1248
    %v1250 = vpop.f32.mrb[0].mxu0
    %v1251 = vadd.f32 %v211, %v1250
    %1252 = vmatprep.mubr.f32.mxu0 0.0
    %1253 = vmatmul.mubr.f32.gmra.mrb[0].mxu0 %v335
    %v1254 = vpop.f32.mrb[0].mxu0
    %v1255 = vadd.f32 %v216, %v1254
    %v1256 = vpop.f32.mrb[0].mxu0
    %v1257 = vadd.f32 %v216, %v1256
    %1258 = vmatprep.mubr.f32.mxu0 0.0
    %1259 = vmatmul.mubr.f32.gmra.mrb[0].mxu0 %v338
    %v1260 = vpop.f32.mrb[0].mxu0
    %v1261 = vadd.f32 %v221, %v1260
    %v1262 = vpop.f32.mrb[0].mxu0
    %v1263 = vadd.f32 %v221, %v1262
    %1264 = vdwg.mxu0
    %v1265 = vtanh.pop %v1243
    %v1266 = vtanh.pop %v1245
    %v1267 = vtanh.pop %v1249
    %v1268 = vtanh.pop %v1251
    %v1269 = vtanh.pop %v1255
    %v1270 = vtanh.pop %v1257
    %v1271 = vtanh.pop %v1261
    %v1272 = vtanh.pop %v1263
    %v1273 = vstv %s1175
    %v1274 = vmul.f32 %v1273, %v1265
    %v1275 = vmul.f32 %v1273, %v1266
    %v1276 = vmul.f32 %v1273, %v1267
    %v1277 = vmul.f32 %v1273, %v1268
    %v1278 = vmul.f32 %v1273, %v1269
    %v1279 = vmul.f32 %v1273, %v1270
    %v1280 = vmul.f32 %v1273, %v1271
    %v1281 = vmul.f32 %v1273, %v1272
    %v1282 = vadd.f32 %v1073, %v1274
    %v1283 = vadd.f32 %v1074, %v1275
    %v1284 = vadd.f32 %v1075, %v1276
    %v1285 = vadd.f32 %v1076, %v1277
    %v1286 = vadd.f32 %v1077, %v1278
    %v1287 = vadd.f32 %v1078, %v1279
    %v1288 = vadd.f32 %v1079, %v1280
    %v1289 = vadd.f32 %v1080, %v1281
    %1290 = vmatprep.subr.mxu0 %v1283
    %1291 = vmatpush1.msra.mxu0 %v1282
    %1292 = vmatprep.subr.mxu0 %v1285
    %1293 = vmatpush1.msra.mxu0 %v1284
    %1294 = vmatprep.subr.mxu0 %v1287
    %1295 = vmatpush1.msra.mxu0 %v1286
    %1296 = vmatprep.subr.mxu0 %v1289
    %1297 = vmatpush1.msra.mxu0 %v1288
    %1298 = vmatprep.subr.mxu0 0.0
    %1299 = vmatpush1.msra.mxu0 0.0
    %1300 = vmatprep.subr.mxu0 0.0
    %1301 = vmatpush1.msra.mxu0 0.0
    %1302 = vmatprep.subr.mxu0 0.0
    %1303 = vmatpush1.msra.mxu0 0.0
    %1304 = vmatprep.subr.mxu0 0.0
    %1305 = vmatpush1.msra.mxu0 0.0
    %1306 = vmatprep.subr.mxu0 0.0
    %1307 = vmatpush1.msra.mxu0 0.0
    %1308 = vmatprep.subr.mxu0 0.0
    %1309 = vmatpush1.msra.mxu0 0.0
    %1310 = vmatprep.subr.mxu0 0.0
    %1311 = vmatpush1.msra.mxu0 0.0
    %1312 = vmatprep.subr.mxu0 0.0
    %1313 = vmatpush1.msra.mxu0 0.0
    %1314 = vmatprep.subr.mxu0 0.0
    %1315 = vmatpush1.msra.mxu0 0.0
    %1316 = vmatprep.subr.mxu0 0.0
    %1317 = vmatpush1.msra.mxu0 0.0
    %1318 = vmatprep.subr.mxu0 0.0
    %1319 = vmatpush1.msra.mxu0 0.0
    %1320 = vmatprep.subr.mxu0 0.0
    %1321 = vmatpush1.msra.mxu0 0.0
    %1322 = vmatprep.subr.mxu0 0.0
    %1323 = vmatpush1.msra.mxu0 0.0
    %1324 = vmatprep.subr.mxu0 0.0
    %1325 = vmatpush1.msra.mxu0 0.0
    %1326 = vmatprep.subr.mxu0 0.0
    %1327 = vmatpush1.msra.mxu0 0.0
    %1328 = vmatprep.subr.mxu0 0.0
    %1329 = vmatpush1.msra.mxu0 0.0
    %1330 = vmatprep.subr.mxu0 0.0
    %1331 = vmatpush1.msra.mxu0 0.0
    %1332 = vmatprep.subr.mxu0 0.0
    %1333 = vmatpush1.msra.mxu0 0.0
    %1334 = vmatprep.subr.mxu0 0.0
    %1335 = vmatpush1.msra.mxu0 0.0
    %1336 = vmatprep.subr.mxu0 0.0
    %1337 = vmatpush1.msra.mxu0 0.0
    %1338 = vmatprep.subr.mxu0 0.0
    %1339 = vmatpush1.msra.mxu0 0.0
    %1340 = vmatprep.subr.mxu0 0.0
    %1341 = vmatpush1.msra.mxu0 0.0
    %1342 = vmatprep.subr.mxu0 0.0
    %1343 = vmatpush1.msra.mxu0 0.0
    %1344 = vmatprep.subr.mxu0 0.0
    %1345 = vmatpush1.msra.mxu0 0.0
    %1346 = vmatprep.subr.mxu0 0.0
    %1347 = vmatpush1.msra.mxu0 0.0
    %1348 = vmatprep.subr.mxu0 0.0
    %1349 = vmatpush1.msra.mxu0 0.0
    %1350 = vmatprep.subr.mxu0 0.0
    %1351 = vmatpush1.msra.mxu0 0.0
    %1352 = vmatprep.subr.mxu0 0.0
    %1353 = vmatpush1.msra.mxu0 0.0
    %1354 = vmatprep.mubr.f32.mxu0 0.0
    %1355 = vmatmul.mubr.f32.gmra.mrb[0].mxu0 %v228
    %v1356 = vpop.f32.mrb[0].mxu0
    %v1357 = vadd.f32 %v225, %v1356
    %v1358 = vpop.f32.mrb[0].mxu0
    %v1359 = vadd.f32 %v225, %v1358
    %1360 = vdwg.mxu0
    %v1363 = vcombine.low %v1357, %v1359
    %v1365 = vunpack.c.l.s4 1966171168
    %v1366 = vunpack.c.0.s8 %v1365
    %v1367 = vlaneseq
    %v1368 = vshrl.u32 %v1367, 7
    %v1369 = vsub.s32 %v1366, %v1368
    %v1370 = vrot.slane %v1363, %v1369
    %v1372 = vunpack.c.l.s4 1966171168
    %v1373 = vunpack.c.0.s8 %v1372
    %v1374 = vlaneseq
    %v1375 = vshrl.u32 %v1374, 7
    %v1376 = vsub.s32 %v1373, %v1375
    %v1377 = vrot.slane %v1370, %v1376
    %s1379 = scalar_lea.vmem [#allocation6], 5
    %1380 = vst.msk [vmem:[%s1379] ss:$8 sm:$0x3] %vm322, %v1377
    %1381 = vst.msk [vmem:[%s1379] ss:$8 sm:$0x0] %vm322, %v1377
    %s1382 = sld [smem:[#allocation3 + $0x6]]
    %s1383 = sld [smem:[#allocation3 + $0x5]]
    %s1384 = ssub.f32 %s1382, %s1383
    %1385 = vmatprep.subr.mxu0 %v1283
    %1386 = vmatpush1.msra.mxu0 %v1282
    %1387 = vmatprep.subr.mxu0 %v1285
    %1388 = vmatpush1.msra.mxu0 %v1284
    %1389 = vmatprep.subr.mxu0 %v1287
    %1390 = vmatpush1.msra.mxu0 %v1286
    %1391 = vmatprep.subr.mxu0 %v1289
    %1392 = vmatpush1.msra.mxu0 %v1288
    %1393 = vmatprep.subr.mxu0 0.0
    %1394 = vmatpush1.msra.mxu0 0.0
    %1395 = vmatprep.subr.mxu0 0.0
    %1396 = vmatpush1.msra.mxu0 0.0
    %1397 = vmatprep.subr.mxu0 0.0
    %1398 = vmatpush1.msra.mxu0 0.0
    %1399 = vmatprep.subr.mxu0 0.0
    %1400 = vmatpush1.msra.mxu0 0.0
    %1401 = vmatprep.subr.mxu0 0.0
    %1402 = vmatpush1.msra.mxu0 0.0
    %1403 = vmatprep.subr.mxu0 0.0
    %1404 = vmatpush1.msra.mxu0 0.0
    %1405 = vmatprep.subr.mxu0 0.0
    %1406 = vmatpush1.msra.mxu0 0.0
    %1407 = vmatprep.subr.mxu0 0.0
    %1408 = vmatpush1.msra.mxu0 0.0
    %1409 = vmatprep.subr.mxu0 0.0
    %1410 = vmatpush1.msra.mxu0 0.0
    %1411 = vmatprep.subr.mxu0 0.0
    %1412 = vmatpush1.msra.mxu0 0.0
    %1413 = vmatprep.subr.mxu0 0.0
    %1414 = vmatpush1.msra.mxu0 0.0
    %1415 = vmatprep.subr.mxu0 0.0
    %1416 = vmatpush1.msra.mxu0 0.0
    %1417 = vmatprep.subr.mxu0 0.0
    %1418 = vmatpush1.msra.mxu0 0.0
    %1419 = vmatprep.subr.mxu0 0.0
    %1420 = vmatpush1.msra.mxu0 0.0
    %1421 = vmatprep.subr.mxu0 0.0
    %1422 = vmatpush1.msra.mxu0 0.0
    %1423 = vmatprep.subr.mxu0 0.0
    %1424 = vmatpush1.msra.mxu0 0.0
    %1425 = vmatprep.subr.mxu0 0.0
    %1426 = vmatpush1.msra.mxu0 0.0
    %1427 = vmatprep.subr.mxu0 0.0
    %1428 = vmatpush1.msra.mxu0 0.0
    %1429 = vmatprep.subr.mxu0 0.0
    %1430 = vmatpush1.msra.mxu0 0.0
    %1431 = vmatprep.subr.mxu0 0.0
    %1432 = vmatpush1.msra.mxu0 0.0
    %1433 = vmatprep.subr.mxu0 0.0
    %1434 = vmatpush1.msra.mxu0 0.0
    %1435 = vmatprep.subr.mxu0 0.0
    %1436 = vmatpush1.msra.mxu0 0.0
    %1437 = vmatprep.subr.mxu0 0.0
    %1438 = vmatpush1.msra.mxu0 0.0
    %1439 = vmatprep.subr.mxu0 0.0
    %1440 = vmatpush1.msra.mxu0 0.0
    %1441 = vmatprep.subr.mxu0 0.0
    %1442 = vmatpush1.msra.mxu0 0.0
    %1443 = vmatprep.subr.mxu0 0.0
    %1444 = vmatpush1.msra.mxu0 0.0
    %1445 = vmatprep.subr.mxu0 0.0
    %1446 = vmatpush1.msra.mxu0 0.0
    %1447 = vmatprep.subr.mxu0 0.0
    %1448 = vmatpush1.msra.mxu0 0.0
    %1449 = vmatprep.mubr.f32.mxu0 0.0
    %1450 = vmatmul.mubr.f32.gmra.mrb[0].mxu0 %v329
    %v1451 = vpop.f32.mrb[0].mxu0
    %v1452 = vadd.f32 %v206, %v1451
    %v1453 = vpop.f32.mrb[0].mxu0
    %v1454 = vadd.f32 %v206, %v1453
    %1455 = vmatprep.mubr.f32.mxu0 0.0
    %1456 = vmatmul.mubr.f32.gmra.mrb[0].mxu0 %v332
    %v1457 = vpop.f32.mrb[0].mxu0
    %v1458 = vadd.f32 %v211, %v1457
    %v1459 = vpop.f32.mrb[0].mxu0
    %v1460 = vadd.f32 %v211, %v1459
    %1461 = vmatprep.mubr.f32.mxu0 0.0
    %1462 = vmatmul.mubr.f32.gmra.mrb[0].mxu0 %v335
    %v1463 = vpop.f32.mrb[0].mxu0
    %v1464 = vadd.f32 %v216, %v1463
    %v1465 = vpop.f32.mrb[0].mxu0
    %v1466 = vadd.f32 %v216, %v1465
    %1467 = vmatprep.mubr.f32.mxu0 0.0
    %1468 = vmatmul.mubr.f32.gmra.mrb[0].mxu0 %v338
    %v1469 = vpop.f32.mrb[0].mxu0
    %v1470 = vadd.f32 %v221, %v1469
    %v1471 = vpop.f32.mrb[0].mxu0
    %v1472 = vadd.f32 %v221, %v1471
    %1473 = vdwg.mxu0
    %v1474 = vtanh.pop %v1452
    %v1475 = vtanh.pop %v1454
    %v1476 = vtanh.pop %v1458
    %v1477 = vtanh.pop %v1460
    %v1478 = vtanh.pop %v1464
    %v1479 = vtanh.pop %v1466
    %v1480 = vtanh.pop %v1470
    %v1481 = vtanh.pop %v1472
    %v1482 = vstv %s1384
    %v1483 = vmul.f32 %v1482, %v1474
    %v1484 = vmul.f32 %v1482, %v1475
    %v1485 = vmul.f32 %v1482, %v1476
    %v1486 = vmul.f32 %v1482, %v1477
    %v1487 = vmul.f32 %v1482, %v1478
    %v1488 = vmul.f32 %v1482, %v1479
    %v1489 = vmul.f32 %v1482, %v1480
    %v1490 = vmul.f32 %v1482, %v1481
    %v1491 = vadd.f32 %v1282, %v1483
    %v1492 = vadd.f32 %v1283, %v1484
    %v1493 = vadd.f32 %v1284, %v1485
    %v1494 = vadd.f32 %v1285, %v1486
    %v1495 = vadd.f32 %v1286, %v1487
    %v1496 = vadd.f32 %v1287, %v1488
    %v1497 = vadd.f32 %v1288, %v1489
    %v1498 = vadd.f32 %v1289, %v1490
    %1499 = vmatprep.subr.mxu0 %v1492
    %1500 = vmatpush1.msra.mxu0 %v1491
    %1501 = vmatprep.subr.mxu0 %v1494
    %1502 = vmatpush1.msra.mxu0 %v1493
    %1503 = vmatprep.subr.mxu0 %v1496
    %1504 = vmatpush1.msra.mxu0 %v1495
    %1505 = vmatprep.subr.mxu0 %v1498
    %1506 = vmatpush1.msra.mxu0 %v1497
    %1507 = vmatprep.subr.mxu0 0.0
    %1508 = vmatpush1.msra.mxu0 0.0
    %1509 = vmatprep.subr.mxu0 0.0
    %1510 = vmatpush1.msra.mxu0 0.0
    %1511 = vmatprep.subr.mxu0 0.0
    %1512 = vmatpush1.msra.mxu0 0.0
    %1513 = vmatprep.subr.mxu0 0.0
    %1514 = vmatpush1.msra.mxu0 0.0
    %1515 = vmatprep.subr.mxu0 0.0
    %1516 = vmatpush1.msra.mxu0 0.0
    %1517 = vmatprep.subr.mxu0 0.0
    %1518 = vmatpush1.msra.mxu0 0.0
    %1519 = vmatprep.subr.mxu0 0.0
    %1520 = vmatpush1.msra.mxu0 0.0
    %1521 = vmatprep.subr.mxu0 0.0
    %1522 = vmatpush1.msra.mxu0 0.0
    %1523 = vmatprep.subr.mxu0 0.0
    %1524 = vmatpush1.msra.mxu0 0.0
    %1525 = vmatprep.subr.mxu0 0.0
    %1526 = vmatpush1.msra.mxu0 0.0
    %1527 = vmatprep.subr.mxu0 0.0
    %1528 = vmatpush1.msra.mxu0 0.0
    %1529 = vmatprep.subr.mxu0 0.0
    %1530 = vmatpush1.msra.mxu0 0.0
    %1531 = vmatprep.subr.mxu0 0.0
    %1532 = vmatpush1.msra.mxu0 0.0
    %1533 = vmatprep.subr.mxu0 0.0
    %1534 = vmatpush1.msra.mxu0 0.0
    %1535 = vmatprep.subr.mxu0 0.0
    %1536 = vmatpush1.msra.mxu0 0.0
    %1537 = vmatprep.subr.mxu0 0.0
    %1538 = vmatpush1.msra.mxu0 0.0
    %1539 = vmatprep.subr.mxu0 0.0
    %1540 = vmatpush1.msra.mxu0 0.0
    %1541 = vmatprep.subr.mxu0 0.0
    %1542 = vmatpush1.msra.mxu0 0.0
    %1543 = vmatprep.subr.mxu0 0.0
    %1544 = vmatpush1.msra.mxu0 0.0
    %1545 = vmatprep.subr.mxu0 0.0
    %1546 = vmatpush1.msra.mxu0 0.0
    %1547 = vmatprep.subr.mxu0 0.0
    %1548 = vmatpush1.msra.mxu0 0.0
    %1549 = vmatprep.subr.mxu0 0.0
    %1550 = vmatpush1.msra.mxu0 0.0
    %1551 = vmatprep.subr.mxu0 0.0
    %1552 = vmatpush1.msra.mxu0 0.0
    %1553 = vmatprep.subr.mxu0 0.0
    %1554 = vmatpush1.msra.mxu0 0.0
    %1555 = vmatprep.subr.mxu0 0.0
    %1556 = vmatpush1.msra.mxu0 0.0
    %1557 = vmatprep.subr.mxu0 0.0
    %1558 = vmatpush1.msra.mxu0 0.0
    %1559 = vmatprep.subr.mxu0 0.0
    %1560 = vmatpush1.msra.mxu0 0.0
    %1561 = vmatprep.subr.mxu0 0.0
    %1562 = vmatpush1.msra.mxu0 0.0
    %1563 = vmatprep.mubr.f32.mxu0 0.0
    %1564 = vmatmul.mubr.f32.gmra.mrb[0].mxu0 %v228
    %v1565 = vpop.f32.mrb[0].mxu0
    %v1566 = vadd.f32 %v225, %v1565
    %v1567 = vpop.f32.mrb[0].mxu0
    %v1568 = vadd.f32 %v225, %v1567
    %1569 = vdwg.mxu0
    %v1572 = vcombine.low %v1566, %v1568
    %v1574 = vunpack.c.l.s4 1966171168
    %v1575 = vunpack.c.0.s8 %v1574
    %v1576 = vlaneseq
    %v1577 = vshrl.u32 %v1576, 7
    %v1578 = vsub.s32 %v1575, %v1577
    %v1579 = vrot.slane %v1572, %v1578
    %v1581 = vunpack.c.l.s4 1966171168
    %v1582 = vunpack.c.0.s8 %v1581
    %v1583 = vlaneseq
    %v1584 = vshrl.u32 %v1583, 7
    %v1585 = vsub.s32 %v1582, %v1584
    %v1586 = vrot.slane %v1579, %v1585
    %s1588 = scalar_lea.vmem [#allocation6], 6
    %1589 = vst.msk [vmem:[%s1588] ss:$8 sm:$0x3] %vm322, %v1586
    %1590 = vst.msk [vmem:[%s1588] ss:$8 sm:$0x0] %vm322, %v1586
    %s1591 = sld [smem:[#allocation3 + $0x7]]
    %s1592 = sld [smem:[#allocation3 + $0x6]]
    %s1593 = ssub.f32 %s1591, %s1592
    %1594 = vmatprep.subr.mxu0 %v1492
    %1595 = vmatpush1.msra.mxu0 %v1491
    %1596 = vmatprep.subr.mxu0 %v1494
    %1597 = vmatpush1.msra.mxu0 %v1493
    %1598 = vmatprep.subr.mxu0 %v1496
    %1599 = vmatpush1.msra.mxu0 %v1495
    %1600 = vmatprep.subr.mxu0 %v1498
    %1601 = vmatpush1.msra.mxu0 %v1497
    %1602 = vmatprep.subr.mxu0 0.0
    %1603 = vmatpush1.msra.mxu0 0.0
    %1604 = vmatprep.subr.mxu0 0.0
    %1605 = vmatpush1.msra.mxu0 0.0
    %1606 = vmatprep.subr.mxu0 0.0
    %1607 = vmatpush1.msra.mxu0 0.0
    %1608 = vmatprep.subr.mxu0 0.0
    %1609 = vmatpush1.msra.mxu0 0.0
    %1610 = vmatprep.subr.mxu0 0.0
    %1611 = vmatpush1.msra.mxu0 0.0
    %1612 = vmatprep.subr.mxu0 0.0
    %1613 = vmatpush1.msra.mxu0 0.0
    %1614 = vmatprep.subr.mxu0 0.0
    %1615 = vmatpush1.msra.mxu0 0.0
    %1616 = vmatprep.subr.mxu0 0.0
    %1617 = vmatpush1.msra.mxu0 0.0
    %1618 = vmatprep.subr.mxu0 0.0
    %1619 = vmatpush1.msra.mxu0 0.0
    %1620 = vmatprep.subr.mxu0 0.0
    %1621 = vmatpush1.msra.mxu0 0.0
    %1622 = vmatprep.subr.mxu0 0.0
    %1623 = vmatpush1.msra.mxu0 0.0
    %1624 = vmatprep.subr.mxu0 0.0
    %1625 = vmatpush1.msra.mxu0 0.0
    %1626 = vmatprep.subr.mxu0 0.0
    %1627 = vmatpush1.msra.mxu0 0.0
    %1628 = vmatprep.subr.mxu0 0.0
    %1629 = vmatpush1.msra.mxu0 0.0
    %1630 = vmatprep.subr.mxu0 0.0
    %1631 = vmatpush1.msra.mxu0 0.0
    %1632 = vmatprep.subr.mxu0 0.0
    %1633 = vmatpush1.msra.mxu0 0.0
    %1634 = vmatprep.subr.mxu0 0.0
    %1635 = vmatpush1.msra.mxu0 0.0
    %1636 = vmatprep.subr.mxu0 0.0
    %1637 = vmatpush1.msra.mxu0 0.0
    %1638 = vmatprep.subr.mxu0 0.0
    %1639 = vmatpush1.msra.mxu0 0.0
    %1640 = vmatprep.subr.mxu0 0.0
    %1641 = vmatpush1.msra.mxu0 0.0
    %1642 = vmatprep.subr.mxu0 0.0
    %1643 = vmatpush1.msra.mxu0 0.0
    %1644 = vmatprep.subr.mxu0 0.0
    %1645 = vmatpush1.msra.mxu0 0.0
    %1646 = vmatprep.subr.mxu0 0.0
    %1647 = vmatpush1.msra.mxu0 0.0
    %1648 = vmatprep.subr.mxu0 0.0
    %1649 = vmatpush1.msra.mxu0 0.0
    %1650 = vmatprep.subr.mxu0 0.0
    %1651 = vmatpush1.msra.mxu0 0.0
    %1652 = vmatprep.subr.mxu0 0.0
    %1653 = vmatpush1.msra.mxu0 0.0
    %1654 = vmatprep.subr.mxu0 0.0
    %1655 = vmatpush1.msra.mxu0 0.0
    %1656 = vmatprep.subr.mxu0 0.0
    %1657 = vmatpush1.msra.mxu0 0.0
    %1658 = vmatprep.mubr.f32.mxu0 0.0
    %1659 = vmatmul.mubr.f32.gmra.mrb[0].mxu0 %v329
    %v1660 = vpop.f32.mrb[0].mxu0
    %v1661 = vadd.f32 %v206, %v1660
    %v1662 = vpop.f32.mrb[0].mxu0
    %v1663 = vadd.f32 %v206, %v1662
    %1664 = vmatprep.mubr.f32.mxu0 0.0
    %1665 = vmatmul.mubr.f32.gmra.mrb[0].mxu0 %v332
    %v1666 = vpop.f32.mrb[0].mxu0
    %v1667 = vadd.f32 %v211, %v1666
    %v1668 = vpop.f32.mrb[0].mxu0
    %v1669 = vadd.f32 %v211, %v1668
    %1670 = vmatprep.mubr.f32.mxu0 0.0
    %1671 = vmatmul.mubr.f32.gmra.mrb[0].mxu0 %v335
    %v1672 = vpop.f32.mrb[0].mxu0
    %v1673 = vadd.f32 %v216, %v1672
    %v1674 = vpop.f32.mrb[0].mxu0
    %v1675 = vadd.f32 %v216, %v1674
    %1676 = vmatprep.mubr.f32.mxu0 0.0
    %1677 = vmatmul.mubr.f32.gmra.mrb[0].mxu0 %v338
    %v1678 = vpop.f32.mrb[0].mxu0
    %v1679 = vadd.f32 %v221, %v1678
    %v1680 = vpop.f32.mrb[0].mxu0
    %v1681 = vadd.f32 %v221, %v1680
    %1682 = vdwg.mxu0
    %v1683 = vtanh.pop %v1661
    %v1684 = vtanh.pop %v1663
    %v1685 = vtanh.pop %v1667
    %v1686 = vtanh.pop %v1669
    %v1687 = vtanh.pop %v1673
    %v1688 = vtanh.pop %v1675
    %v1689 = vtanh.pop %v1679
    %v1690 = vtanh.pop %v1681
    %v1691 = vstv %s1593
    %v1692 = vmul.f32 %v1691, %v1683
    %v1693 = vmul.f32 %v1691, %v1684
    %v1694 = vmul.f32 %v1691, %v1685
    %v1695 = vmul.f32 %v1691, %v1686
    %v1696 = vmul.f32 %v1691, %v1687
    %v1697 = vmul.f32 %v1691, %v1688
    %v1698 = vmul.f32 %v1691, %v1689
    %v1699 = vmul.f32 %v1691, %v1690
    %v1700 = vadd.f32 %v1491, %v1692
    %v1701 = vadd.f32 %v1492, %v1693
    %v1702 = vadd.f32 %v1493, %v1694
    %v1703 = vadd.f32 %v1494, %v1695
    %v1704 = vadd.f32 %v1495, %v1696
    %v1705 = vadd.f32 %v1496, %v1697
    %v1706 = vadd.f32 %v1497, %v1698
    %v1707 = vadd.f32 %v1498, %v1699
    %1708 = vmatprep.subr.mxu0 %v1701
    %1709 = vmatpush1.msra.mxu0 %v1700
    %1710 = vmatprep.subr.mxu0 %v1703
    %1711 = vmatpush1.msra.mxu0 %v1702
    %1712 = vmatprep.subr.mxu0 %v1705
    %1713 = vmatpush1.msra.mxu0 %v1704
    %1714 = vmatprep.subr.mxu0 %v1707
    %1715 = vmatpush1.msra.mxu0 %v1706
    %1716 = vmatprep.subr.mxu0 0.0
    %1717 = vmatpush1.msra.mxu0 0.0
    %1718 = vmatprep.subr.mxu0 0.0
    %1719 = vmatpush1.msra.mxu0 0.0
    %1720 = vmatprep.subr.mxu0 0.0
    %1721 = vmatpush1.msra.mxu0 0.0
    %1722 = vmatprep.subr.mxu0 0.0
    %1723 = vmatpush1.msra.mxu0 0.0
    %1724 = vmatprep.subr.mxu0 0.0
    %1725 = vmatpush1.msra.mxu0 0.0
    %1726 = vmatprep.subr.mxu0 0.0
    %1727 = vmatpush1.msra.mxu0 0.0
    %1728 = vmatprep.subr.mxu0 0.0
    %1729 = vmatpush1.msra.mxu0 0.0
    %1730 = vmatprep.subr.mxu0 0.0
    %1731 = vmatpush1.msra.mxu0 0.0
    %1732 = vmatprep.subr.mxu0 0.0
    %1733 = vmatpush1.msra.mxu0 0.0
    %1734 = vmatprep.subr.mxu0 0.0
    %1735 = vmatpush1.msra.mxu0 0.0
    %1736 = vmatprep.subr.mxu0 0.0
    %1737 = vmatpush1.msra.mxu0 0.0
    %1738 = vmatprep.subr.mxu0 0.0
    %1739 = vmatpush1.msra.mxu0 0.0
    %1740 = vmatprep.subr.mxu0 0.0
    %1741 = vmatpush1.msra.mxu0 0.0
    %1742 = vmatprep.subr.mxu0 0.0
    %1743 = vmatpush1.msra.mxu0 0.0
    %1744 = vmatprep.subr.mxu0 0.0
    %1745 = vmatpush1.msra.mxu0 0.0
    %1746 = vmatprep.subr.mxu0 0.0
    %1747 = vmatpush1.msra.mxu0 0.0
    %1748 = vmatprep.subr.mxu0 0.0
    %1749 = vmatpush1.msra.mxu0 0.0
    %1750 = vmatprep.subr.mxu0 0.0
    %1751 = vmatpush1.msra.mxu0 0.0
    %1752 = vmatprep.subr.mxu0 0.0
    %1753 = vmatpush1.msra.mxu0 0.0
    %1754 = vmatprep.subr.mxu0 0.0
    %1755 = vmatpush1.msra.mxu0 0.0
    %1756 = vmatprep.subr.mxu0 0.0
    %1757 = vmatpush1.msra.mxu0 0.0
    %1758 = vmatprep.subr.mxu0 0.0
    %1759 = vmatpush1.msra.mxu0 0.0
    %1760 = vmatprep.subr.mxu0 0.0
    %1761 = vmatpush1.msra.mxu0 0.0
    %1762 = vmatprep.subr.mxu0 0.0
    %1763 = vmatpush1.msra.mxu0 0.0
    %1764 = vmatprep.subr.mxu0 0.0
    %1765 = vmatpush1.msra.mxu0 0.0
    %1766 = vmatprep.subr.mxu0 0.0
    %1767 = vmatpush1.msra.mxu0 0.0
    %1768 = vmatprep.subr.mxu0 0.0
    %1769 = vmatpush1.msra.mxu0 0.0
    %1770 = vmatprep.subr.mxu0 0.0
    %1771 = vmatpush1.msra.mxu0 0.0
    %1772 = vmatprep.mubr.f32.mxu0 0.0
    %1773 = vmatmul.mubr.f32.gmra.mrb[0].mxu0 %v228
    %v1774 = vpop.f32.mrb[0].mxu0
    %v1775 = vadd.f32 %v225, %v1774
    %v1776 = vpop.f32.mrb[0].mxu0
    %v1777 = vadd.f32 %v225, %v1776
    %1778 = vdwg.mxu0
    %v1781 = vcombine.low %v1775, %v1777
    %v1783 = vunpack.c.l.s4 1966171168
    %v1784 = vunpack.c.0.s8 %v1783
    %v1785 = vlaneseq
    %v1786 = vshrl.u32 %v1785, 7
    %v1787 = vsub.s32 %v1784, %v1786
    %v1788 = vrot.slane %v1781, %v1787
    %v1790 = vunpack.c.l.s4 1966171168
    %v1791 = vunpack.c.0.s8 %v1790
    %v1792 = vlaneseq
    %v1793 = vshrl.u32 %v1792, 7
    %v1794 = vsub.s32 %v1791, %v1793
    %v1795 = vrot.slane %v1788, %v1794
    %s1797 = scalar_lea.vmem [#allocation6], 7
    %1798 = vst.msk [vmem:[%s1797] ss:$8 sm:$0x3] %vm322, %v1795
    %1799 = vst.msk [vmem:[%s1797] ss:$8 sm:$0x0] %vm322, %v1795
    // Predicated region
    $region38: #{tpu_custom_call.1} parent=1 // pred_check
      _
    $region39: #{tpu_custom_call.1} parent=1 // pred_check_branch
      %1801 = sbr.rel (0) target = $region41
    $region40: #{tpu_custom_call.1} parent=1 // pred_region
      %s1803 = ssub.s32 256, 256
      %1804 = vsyncadd [#allocation4], %s1803
      %s1806 = sshll.u32 [#allocation6], 4
      %s1807 = int_to_ptr.vmem [resolvable:$true] %s1806
      %1809 = dma.vmem_to_hbm [thread:$0]  %s1807, 256, %s8, [#allocation4]
    $region41: #{tpu_custom_call.1} parent=1 // pred_fallthru
      _
    // Predicated region
    $region42: #{tpu_custom_call.1} parent=1 // pred_check
      _
    $region43: #{tpu_custom_call.1} parent=1 // pred_check_branch
      %1811 = sbr.rel (0) target = $region45
    $region44: #{tpu_custom_call.1} parent=1 // pred_region
      %1812 = dma.done [#allocation4], 256
    $region45: #{tpu_custom_call.1} parent=1 // pred_fallthru
      _
    %1813 = vsyncpa [#allocation4], 1
    %1814 = vsyncpa [#allocation5], 1

</llo_original>
